<compile_context>
chip_gen: v6e
topology: v6e:2x2x1
jax: 0.10.0
libtpu: 0.0.40
codegen_flags: <defaults>
</compile_context>

<pallas_src>
import jax
import jax.numpy as jnp
from jax.experimental import pallas as pl
from jax.experimental.pallas import tpu as pltpu


# ---------------------------------------------------------------------------
# Fused kernel: wavefront over (layers x time) + fc, one invocation
# ---------------------------------------------------------------------------
def _make_fused_kernel(num_layers, seq_len, batch_p, hidden):
    L, T, Bp, H = num_layers, seq_len, batch_p, hidden
    G = 4 * H

    def kernel(x_ref, wih0_ref, bias_ref, rhs_ref, fcw_ref, fcb_ref,
               out_ref, xproj_ref, hslab_ref):
        # ---- hoisted layer-0 input projection for ALL timesteps ----
        # (T*Bp, D) x (D, 4H) bf16 -> f32, bias added once; parked in VMEM.
        xproj_ref[...] = (
            jnp.dot(x_ref[...], wih0_ref[...],
                    preferred_element_type=jnp.float32)
            + bias_ref[pl.ds(0, 1), :]
        )

        # Biases for layers >= 1, broadcast once (outside the recurrence).
        b_rest = [jnp.broadcast_to(bias_ref[pl.ds(l, 1), :], (Bp, G))
                  for l in range(1, L)]

        # Fused wavefront RHS, resident for the whole recurrence.
        rhs = rhs_ref[...]                                     # (L*H, L*4H) bf16

        h = [jnp.zeros((Bp, H), jnp.float32) for _ in range(L)]
        c = [jnp.zeros((Bp, H), jnp.float32) for _ in range(L)]

        # ---- wavefront: step s updates layer l at time t = s - l ----
        for s in range(T + L - 1):
            lhs = jnp.concatenate(
                [hl.astype(jnp.bfloat16) for hl in h], axis=1)  # (Bp, L*H)
            # One MXU push per wavefront step covering every active layer:
            #   col-block l = h_{l-1,t} @ W_ih_l^T + h_{l,t-1} @ W_hh_l^T
            gall = jnp.dot(lhs, rhs,
                           preferred_element_type=jnp.float32)  # (Bp, L*4H)

            for l in range(L):
                t = s - l
                if t < 0 or t >= T:
                    continue
                g = gall[:, l * G:(l + 1) * G]                  # (Bp, 4H) f32
                if l == 0:
                    g = g + xproj_ref[pl.ds(t * Bp, Bp), :]
                else:
                    g = g + b_rest[l - 1]

                # PyTorch gate order [i, f, g, o]; 2 EUP pushes instead of 4:
                # sigmoid over the full gate vreg, tanh only on the g slice.
                sg = jax.nn.sigmoid(g)
                i_g = sg[:, 0 * H:1 * H]
                f_g = sg[:, 1 * H:2 * H]
                o_g = sg[:, 3 * H:4 * H]
                g_g = jnp.tanh(g[:, 2 * H:3 * H])

                c[l] = f_g * c[l] + i_g * g_g
                h[l] = o_g * jnp.tanh(c[l])

                # Only the top layer's hidden states are materialized.
                if l == L - 1:
                    hslab_ref[pl.ds(t * Bp, Bp), :] = h[l]

        # ---- fused fc: one matmul, lane-dense (Opad=multiple of 128) store ----
        out_ref[...] = (
            jnp.dot(hslab_ref[...].astype(jnp.bfloat16), fcw_ref[...],
                    preferred_element_type=jnp.float32)
            + fcb_ref[...]
        ).astype(out_ref.dtype)

    return kernel


# ---------------------------------------------------------------------------
# One-time parameter preparation (hoisted out of the inference path)
# ---------------------------------------------------------------------------
def prepare_params(params):
    lstm = params["lstm"]
    L = len(lstm)
    H = lstm[0][1].shape[1]              # w_hh: (4H, H)
    G = 4 * H
    O = params["fc_w"].shape[0]
    Opad = max(128, ((O + 127) // 128) * 128)

    # Layer-0 input weight (transposed, bf16) and per-layer combined biases.
    wih0_t = jnp.transpose(lstm[0][0]).astype(jnp.bfloat16)              # (D, 4H)
    bias = jnp.stack([(b_ih + b_hh).astype(jnp.float32)
                      for (_, _, b_ih, b_hh) in lstm], axis=0)           # (L, 4H)

    # Fused wavefront RHS block matrix (L*H, L*4H):
    #   row-block l / col-block l   : W_hh_l^T        (layer-l recurrence)
    #   row-block l / col-block l+1 : W_ih_{l+1}^T    (layer-(l+1) input proj)
    rhs = jnp.zeros((L * H, L * G), jnp.float32)
    for l in range(L):
        w_hh_t = jnp.transpose(lstm[l][1])                               # (H, 4H)
        rhs = rhs.at[l * H:(l + 1) * H, l * G:(l + 1) * G].set(w_hh_t)
        if l + 1 < L:
            w_ih_next_t = jnp.transpose(lstm[l + 1][0])                  # (H, 4H)
            rhs = rhs.at[l * H:(l + 1) * H,
                         (l + 1) * G:(l + 2) * G].set(w_ih_next_t)
    rhs = rhs.astype(jnp.bfloat16)

    fc_w_t = jnp.pad(jnp.transpose(params["fc_w"]),
                     ((0, 0), (0, Opad - O))).astype(jnp.bfloat16)       # (H, Opad)
    fc_b = jnp.pad(params["fc_b"], (0, Opad - O)).reshape(1, Opad)       # (1, Opad)
    fc_b = fc_b.astype(jnp.float32)

    arrays = {"wih0_t": wih0_t, "bias": bias, "rhs": rhs,
              "fc_w_t": fc_w_t, "fc_b": fc_b}
    return arrays, O


# ---------------------------------------------------------------------------
# Forward wrapper (jit with static output_dim); single fused pallas_call
# ---------------------------------------------------------------------------
def custom_model_forward(x, p, out_dim):
    T, B, D = x.shape
    wih0_t, bias, rhs = p["wih0_t"], p["bias"], p["rhs"]
    fc_w_t, fc_b = p["fc_w_t"], p["fc_b"]

    L = bias.shape[0]
    H = wih0_t.shape[1] // 4
    Opad = fc_w_t.shape[1]

    # Pad batch to the 8-sublane width (row-independent math; padded rows are
    # sliced off afterwards).  Matmul operands are bf16; gate math stays f32.
    Bp = ((B + 7) // 8) * 8
    xp = x.astype(jnp.bfloat16)
    if Bp != B:
        xp = jnp.pad(xp, ((0, 0), (0, Bp - B), (0, 0)))
    xp = xp.reshape(T * Bp, D)                                 # t-major rows

    kernel = _make_fused_kernel(L, T, Bp, H)
    out = pl.pallas_call(
        kernel,
        out_shape=jax.ShapeDtypeStruct((T * Bp, Opad), jnp.float32),
        in_specs=[pl.BlockSpec(memory_space=pltpu.MemorySpace.VMEM)] * 6,
        out_specs=pl.BlockSpec(memory_space=pltpu.MemorySpace.VMEM),
        scratch_shapes=[
            pltpu.VMEM((T * Bp, 4 * H), jnp.float32),          # hoisted x-proj slab
            pltpu.VMEM((T * Bp, H), jnp.float32),              # top-layer h slab
        ],
    )(xp, wih0_t, bias, rhs, fc_w_t, fc_b)

    return out.reshape(T, Bp, Opad)[:, :B, :out_dim].astype(x.dtype)


# ---------------------------------------------------------------------------
# Pure-JAX reference (mirrors PyTorch nn.LSTM + nn.Linear semantics)
# ---------------------------------------------------------------------------
def reference_forward(x, params):
    out = x
    for (w_ih, w_hh, b_ih, b_hh) in params["lstm"]:
        T, B, _ = out.shape
        H = w_hh.shape[1]
        h = jnp.zeros((B, H), jnp.float32)
        c = jnp.zeros((B, H), jnp.float32)
        ys = []
        for t in range(T):
            g = out[t] @ w_ih.T + b_ih + h @ w_hh.T + b_hh
            i = jax.nn.sigmoid(g[:, 0 * H:1 * H])
            f = jax.nn.sigmoid(g[:, 1 * H:2 * H])
            gg = jnp.tanh(g[:, 2 * H:3 * H])
            o = jax.nn.sigmoid(g[:, 3 * H:4 * H])
            c = f * c + i * gg
            h = o * jnp.tanh(c)
            ys.append(h)
        out = jnp.stack(ys, axis=0)
    return out @ params["fc_w"].T + params["fc_b"]


def init_params(key, input_dim, hidden_dim, output_dim, layers):
    params = {"lstm": []}
    scale = 0.1
    for l in range(layers):
        d_in = input_dim if l == 0 else hidden_dim
        key, k1, k2, k3, k4 = jax.random.split(key, 5)
        w_ih = scale * jax.random.normal(k1, (4 * hidden_dim, d_in), jnp.float32)
        w_hh = scale * jax.random.normal(k2, (4 * hidden_dim, hidden_dim), jnp.float32)
        b_ih = scale * jax.random.normal(k3, (4 * hidden_dim,), jnp.float32)
        b_hh = scale * jax.random.normal(k4, (4 * hidden_dim,), jnp.float32)
        params["lstm"].append((w_ih, w_hh, b_ih, b_hh))
    key, k5, k6 = jax.random.split(key, 3)
    params["fc_w"] = scale * jax.random.normal(k5, (output_dim, hidden_dim), jnp.float32)
    params["fc_b"] = scale * jax.random.normal(k6, (output_dim,), jnp.float32)
    return params


if __name__ == "__main__":
    SEQ, BATCH = 8, 4
    INPUT_DIM, HIDDEN_DIM, OUTPUT_DIM, LAYERS = 16, 32, 8, 2

    key = jax.random.PRNGKey(0)
    key, xk = jax.random.split(key)
    x = jax.random.normal(xk, (SEQ, BATCH, INPUT_DIM), jnp.float32)
    params = init_params(key, INPUT_DIM, HIDDEN_DIM, OUTPUT_DIM, LAYERS)

    # One-time parameter prep (transposes / bias sums / block-RHS / bf16 casts)
    # hoisted out of the per-call inference path.
    arrays, out_dim = prepare_params(params)
    arrays = jax.tree_util.tree_map(jax.block_until_ready, arrays)

    forward = jax.jit(custom_model_forward, static_argnums=(2,))
    out = forward(x, arrays, out_dim)
    out = jax.block_until_ready(out)

    assert out.shape == (SEQ, BATCH, OUTPUT_DIM)
    assert out.dtype == jnp.float32

    # Sanity-check against a pure-JAX f32 reference (kernel deliberately uses
    # bf16 matmul operands with f32 accumulation / f32 gate math).
    ref = jax.jit(reference_forward)(x, params)
    ref = jax.block_until_ready(ref)
    max_diff = float(jnp.max(jnp.abs(out - ref)))
    assert max_diff < 2e-2, f"mismatch vs reference: {max_diff}"

    print("KERNEL_OK")
</pallas_src>

<mosaic_0001>
module attributes {stable_mosaic.version = 11 : i64} {
  func.func @kernel(%arg0: memref<64x16xbf16, #tpu.memory_space<vmem>>, %arg1: memref<16x128xbf16, #tpu.memory_space<vmem>>, %arg2: memref<2x128xf32, #tpu.memory_space<vmem>>, %arg3: memref<64x256xbf16, #tpu.memory_space<vmem>>, %arg4: memref<32x128xbf16, #tpu.memory_space<vmem>>, %arg5: memref<1x128xf32, #tpu.memory_space<vmem>>, %arg6: memref<64x128xf32, #tpu.memory_space<vmem>>, %arg7: memref<64x128xf32, #tpu.memory_space<vmem>>, %arg8: memref<64x32xf32, #tpu.memory_space<vmem>>) attributes {dimension_semantics = [], scalar_prefetch = 0 : i64, scratch_operands = 2 : i64, tpu.core_type = #tpu.core_type<tc>} {
    %c0 = arith.constant 0 : index
    %c0_0 = arith.constant 0 : index
    %0 = vector.load %arg0[%c0, %c0_0] : memref<64x16xbf16, #tpu.memory_space<vmem>>, vector<64x16xbf16>
    %c0_1 = arith.constant 0 : index
    %c0_2 = arith.constant 0 : index
    %1 = vector.load %arg1[%c0_1, %c0_2] : memref<16x128xbf16, #tpu.memory_space<vmem>>, vector<16x128xbf16>
    %cst = arith.constant dense<0.000000e+00> : vector<64x128xf32>
    %2 = tpu.matmul %0, %1, %cst {dimension_numbers = #tpu.dot_dimension_numbers<[1], [0], [0], [1], [0, 0, 1, 1], [], []>} : vector<64x16xbf16>, vector<16x128xbf16>, vector<64x128xf32> -> vector<64x128xf32>
    %c0_3 = arith.constant 0 : index
    %c0_4 = arith.constant 0 : index
    %3 = vector.load %arg2[%c0_3, %c0_4] : memref<2x128xf32, #tpu.memory_space<vmem>>, vector<1x128xf32>
    %4 = vector.broadcast %3 : vector<1x128xf32> to vector<64x128xf32>
    %5 = arith.addf %2, %4 : vector<64x128xf32>
    %c0_5 = arith.constant 0 : index
    %c0_6 = arith.constant 0 : index
    %6 = vector.load %arg7[%c0_5, %c0_6] : memref<64x128xf32, #tpu.memory_space<vmem>>, vector<64x128xf32>
    tpu.vector_store %arg7[%c0_5, %c0_6], %5 {strides = array<i32>} : memref<64x128xf32, #tpu.memory_space<vmem>>, vector<64x128xf32>,
    %c1 = arith.constant 1 : index
    %c0_7 = arith.constant 0 : index
    %7 = vector.load %arg2[%c1, %c0_7] : memref<2x128xf32, #tpu.memory_space<vmem>>, vector<1x128xf32>
    %8 = vector.shape_cast %7 : vector<1x128xf32> to vector<1x128xf32>
    %9 = vector.broadcast %8 : vector<1x128xf32> to vector<8x128xf32>
    %c0_8 = arith.constant 0 : index
    %c0_9 = arith.constant 0 : index
    %10 = vector.load %arg3[%c0_8, %c0_9] : memref<64x256xbf16, #tpu.memory_space<vmem>>, vector<64x256xbf16>
    %cst_10 = arith.constant 0.000000e+00 : f32
    %11 = vector.broadcast %cst_10 : f32 to vector<8x32xf32>
    %cst_11 = arith.constant 0.000000e+00 : f32
    %12 = vector.broadcast %cst_11 : f32 to vector<8x32xf32>
    %cst_12 = arith.constant 0.000000e+00 : f32
    %13 = vector.broadcast %cst_12 : f32 to vector<8x32xf32>
    %cst_13 = arith.constant 0.000000e+00 : f32
    %14 = vector.broadcast %cst_13 : f32 to vector<8x32xf32>
    %15 = arith.truncf %11 : vector<8x32xf32> to vector<8x32xbf16>
    %16 = arith.truncf %12 : vector<8x32xf32> to vector<8x32xbf16>
    %17 = tpu.concatenate %15, %16 in 1 : vector<8x32xbf16>, vector<8x32xbf16> -> vector<8x64xbf16>
    %cst_14 = arith.constant dense<0.000000e+00> : vector<8x256xf32>
    %18 = tpu.matmul %17, %10, %cst_14 {dimension_numbers = #tpu.dot_dimension_numbers<[1], [0], [0], [1], [0, 0, 1, 1], [], []>} : vector<8x64xbf16>, vector<64x256xbf16>, vector<8x256xf32> -> vector<8x256xf32>
    %19 = vector.extract_strided_slice %18 {offsets = [0, 0], sizes = [8, 128], strides = [1, 1]} : vector<8x256xf32> to vector<8x128xf32>
    %c0_15 = arith.constant 0 : index
    %c0_16 = arith.constant 0 : index
    %20 = vector.load %arg7[%c0_15, %c0_16] : memref<64x128xf32, #tpu.memory_space<vmem>>, vector<8x128xf32>
    %21 = arith.addf %19, %20 : vector<8x128xf32>
    %22 = arith.negf %21 : vector<8x128xf32>
    %23 = math.exp %22 : vector<8x128xf32>
    %cst_17 = arith.constant 1.000000e+00 : f32
    %24 = vector.broadcast %cst_17 : f32 to vector<8x128xf32>
    %25 = arith.addf %24, %23 : vector<8x128xf32>
    %26 = arith.divf %24, %25 : vector<8x128xf32>
    %27 = vector.extract_strided_slice %26 {offsets = [0, 0], sizes = [8, 32], strides = [1, 1]} : vector<8x128xf32> to vector<8x32xf32>
    %28 = vector.extract_strided_slice %26 {offsets = [0, 32], sizes = [8, 32], strides = [1, 1]} : vector<8x128xf32> to vector<8x32xf32>
    %29 = vector.extract_strided_slice %26 {offsets = [0, 96], sizes = [8, 32], strides = [1, 1]} : vector<8x128xf32> to vector<8x32xf32>
    %30 = vector.extract_strided_slice %21 {offsets = [0, 64], sizes = [8, 32], strides = [1, 1]} : vector<8x128xf32> to vector<8x32xf32>
    %31 = math.tanh %30 : vector<8x32xf32>
    %32 = arith.mulf %28, %13 : vector<8x32xf32>
    %33 = arith.mulf %27, %31 : vector<8x32xf32>
    %34 = arith.addf %32, %33 : vector<8x32xf32>
    %35 = math.tanh %34 : vector<8x32xf32>
    %36 = arith.mulf %29, %35 : vector<8x32xf32>
    %37 = arith.truncf %36 : vector<8x32xf32> to vector<8x32xbf16>
    %38 = arith.truncf %12 : vector<8x32xf32> to vector<8x32xbf16>
    %39 = tpu.concatenate %37, %38 in 1 : vector<8x32xbf16>, vector<8x32xbf16> -> vector<8x64xbf16>
    %cst_18 = arith.constant dense<0.000000e+00> : vector<8x256xf32>
    %40 = tpu.matmul %39, %10, %cst_18 {dimension_numbers = #tpu.dot_dimension_numbers<[1], [0], [0], [1], [0, 0, 1, 1], [], []>} : vector<8x64xbf16>, vector<64x256xbf16>, vector<8x256xf32> -> vector<8x256xf32>
    %41 = vector.extract_strided_slice %40 {offsets = [0, 0], sizes = [8, 128], strides = [1, 1]} : vector<8x256xf32> to vector<8x128xf32>
    %c8 = arith.constant 8 : index
    %c0_19 = arith.constant 0 : index
    %42 = vector.load %arg7[%c8, %c0_19] : memref<64x128xf32, #tpu.memory_space<vmem>>, vector<8x128xf32>
    %43 = arith.addf %41, %42 : vector<8x128xf32>
    %44 = arith.negf %43 : vector<8x128xf32>
    %45 = math.exp %44 : vector<8x128xf32>
    %cst_20 = arith.constant 1.000000e+00 : f32
    %46 = vector.broadcast %cst_20 : f32 to vector<8x128xf32>
    %47 = arith.addf %46, %45 : vector<8x128xf32>
    %48 = arith.divf %46, %47 : vector<8x128xf32>
    %49 = vector.extract_strided_slice %48 {offsets = [0, 0], sizes = [8, 32], strides = [1, 1]} : vector<8x128xf32> to vector<8x32xf32>
    %50 = vector.extract_strided_slice %48 {offsets = [0, 32], sizes = [8, 32], strides = [1, 1]} : vector<8x128xf32> to vector<8x32xf32>
    %51 = vector.extract_strided_slice %48 {offsets = [0, 96], sizes = [8, 32], strides = [1, 1]} : vector<8x128xf32> to vector<8x32xf32>
    %52 = vector.extract_strided_slice %43 {offsets = [0, 64], sizes = [8, 32], strides = [1, 1]} : vector<8x128xf32> to vector<8x32xf32>
    %53 = math.tanh %52 : vector<8x32xf32>
    %54 = arith.mulf %50, %34 : vector<8x32xf32>
    %55 = arith.mulf %49, %53 : vector<8x32xf32>
    %56 = arith.addf %54, %55 : vector<8x32xf32>
    %57 = math.tanh %56 : vector<8x32xf32>
    %58 = arith.mulf %51, %57 : vector<8x32xf32>
    %59 = vector.extract_strided_slice %40 {offsets = [0, 128], sizes = [8, 128], strides = [1, 1]} : vector<8x256xf32> to vector<8x128xf32>
    %60 = arith.addf %59, %9 : vector<8x128xf32>
    %61 = arith.negf %60 : vector<8x128xf32>
    %62 = math.exp %61 : vector<8x128xf32>
    %cst_21 = arith.constant 1.000000e+00 : f32
    %63 = vector.broadcast %cst_21 : f32 to vector<8x128xf32>
    %64 = arith.addf %63, %62 : vector<8x128xf32>
    %65 = arith.divf %63, %64 : vector<8x128xf32>
    %66 = vector.extract_strided_slice %65 {offsets = [0, 0], sizes = [8, 32], strides = [1, 1]} : vector<8x128xf32> to vector<8x32xf32>
    %67 = vector.extract_strided_slice %65 {offsets = [0, 32], sizes = [8, 32], strides = [1, 1]} : vector<8x128xf32> to vector<8x32xf32>
    %68 = vector.extract_strided_slice %65 {offsets = [0, 96], sizes = [8, 32], strides = [1, 1]} : vector<8x128xf32> to vector<8x32xf32>
    %69 = vector.extract_strided_slice %60 {offsets = [0, 64], sizes = [8, 32], strides = [1, 1]} : vector<8x128xf32> to vector<8x32xf32>
    %70 = math.tanh %69 : vector<8x32xf32>
    %71 = arith.mulf %67, %14 : vector<8x32xf32>
    %72 = arith.mulf %66, %70 : vector<8x32xf32>
    %73 = arith.addf %71, %72 : vector<8x32xf32>
    %74 = math.tanh %73 : vector<8x32xf32>
    %75 = arith.mulf %68, %74 : vector<8x32xf32>
    %c0_22 = arith.constant 0 : index
    %c0_23 = arith.constant 0 : index
    %76 = vector.load %arg8[%c0_22, %c0_23] : memref<64x32xf32, #tpu.memory_space<vmem>>, vector<8x32xf32>
    tpu.vector_store %arg8[%c0_22, %c0_23], %75 {strides = array<i32>} : memref<64x32xf32, #tpu.memory_space<vmem>>, vector<8x32xf32>,
    %77 = arith.truncf %58 : vector<8x32xf32> to vector<8x32xbf16>
    %78 = arith.truncf %75 : vector<8x32xf32> to vector<8x32xbf16>
    %79 = tpu.concatenate %77, %78 in 1 : vector<8x32xbf16>, vector<8x32xbf16> -> vector<8x64xbf16>
    %cst_24 = arith.constant dense<0.000000e+00> : vector<8x256xf32>
    %80 = tpu.matmul %79, %10, %cst_24 {dimension_numbers = #tpu.dot_dimension_numbers<[1], [0], [0], [1], [0, 0, 1, 1], [], []>} : vector<8x64xbf16>, vector<64x256xbf16>, vector<8x256xf32> -> vector<8x256xf32>
    %81 = vector.extract_strided_slice %80 {offsets = [0, 0], sizes = [8, 128], strides = [1, 1]} : vector<8x256xf32> to vector<8x128xf32>
    %c16 = arith.constant 16 : index
    %c0_25 = arith.constant 0 : index
    %82 = vector.load %arg7[%c16, %c0_25] : memref<64x128xf32, #tpu.memory_space<vmem>>, vector<8x128xf32>
    %83 = arith.addf %81, %82 : vector<8x128xf32>
    %84 = arith.negf %83 : vector<8x128xf32>
    %85 = math.exp %84 : vector<8x128xf32>
    %cst_26 = arith.constant 1.000000e+00 : f32
    %86 = vector.broadcast %cst_26 : f32 to vector<8x128xf32>
    %87 = arith.addf %86, %85 : vector<8x128xf32>
    %88 = arith.divf %86, %87 : vector<8x128xf32>
    %89 = vector.extract_strided_slice %88 {offsets = [0, 0], sizes = [8, 32], strides = [1, 1]} : vector<8x128xf32> to vector<8x32xf32>
    %90 = vector.extract_strided_slice %88 {offsets = [0, 32], sizes = [8, 32], strides = [1, 1]} : vector<8x128xf32> to vector<8x32xf32>
    %91 = vector.extract_strided_slice %88 {offsets = [0, 96], sizes = [8, 32], strides = [1, 1]} : vector<8x128xf32> to vector<8x32xf32>
    %92 = vector.extract_strided_slice %83 {offsets = [0, 64], sizes = [8, 32], strides = [1, 1]} : vector<8x128xf32> to vector<8x32xf32>
    %93 = math.tanh %92 : vector<8x32xf32>
    %94 = arith.mulf %90, %56 : vector<8x32xf32>
    %95 = arith.mulf %89, %93 : vector<8x32xf32>
    %96 = arith.addf %94, %95 : vector<8x32xf32>
    %97 = math.tanh %96 : vector<8x32xf32>
    %98 = arith.mulf %91, %97 : vector<8x32xf32>
    %99 = vector.extract_strided_slice %80 {offsets = [0, 128], sizes = [8, 128], strides = [1, 1]} : vector<8x256xf32> to vector<8x128xf32>
    %100 = arith.addf %99, %9 : vector<8x128xf32>
    %101 = arith.negf %100 : vector<8x128xf32>
    %102 = math.exp %101 : vector<8x128xf32>
    %cst_27 = arith.constant 1.000000e+00 : f32
    %103 = vector.broadcast %cst_27 : f32 to vector<8x128xf32>
    %104 = arith.addf %103, %102 : vector<8x128xf32>
    %105 = arith.divf %103, %104 : vector<8x128xf32>
    %106 = vector.extract_strided_slice %105 {offsets = [0, 0], sizes = [8, 32], strides = [1, 1]} : vector<8x128xf32> to vector<8x32xf32>
    %107 = vector.extract_strided_slice %105 {offsets = [0, 32], sizes = [8, 32], strides = [1, 1]} : vector<8x128xf32> to vector<8x32xf32>
    %108 = vector.extract_strided_slice %105 {offsets = [0, 96], sizes = [8, 32], strides = [1, 1]} : vector<8x128xf32> to vector<8x32xf32>
    %109 = vector.extract_strided_slice %100 {offsets = [0, 64], sizes = [8, 32], strides = [1, 1]} : vector<8x128xf32> to vector<8x32xf32>
    %110 = math.tanh %109 : vector<8x32xf32>
    %111 = arith.mulf %107, %73 : vector<8x32xf32>
    %112 = arith.mulf %106, %110 : vector<8x32xf32>
    %113 = arith.addf %111, %112 : vector<8x32xf32>
    %114 = math.tanh %113 : vector<8x32xf32>
    %115 = arith.mulf %108, %114 : vector<8x32xf32>
    %c8_28 = arith.constant 8 : index
    %c0_29 = arith.constant 0 : index
    %116 = vector.load %arg8[%c8_28, %c0_29] : memref<64x32xf32, #tpu.memory_space<vmem>>, vector<8x32xf32>
    tpu.vector_store %arg8[%c8_28, %c0_29], %115 {strides = array<i32>} : memref<64x32xf32, #tpu.memory_space<vmem>>, vector<8x32xf32>,
    %117 = arith.truncf %98 : vector<8x32xf32> to vector<8x32xbf16>
    %118 = arith.truncf %115 : vector<8x32xf32> to vector<8x32xbf16>
    %119 = tpu.concatenate %117, %118 in 1 : vector<8x32xbf16>, vector<8x32xbf16> -> vector<8x64xbf16>
    %cst_30 = arith.constant dense<0.000000e+00> : vector<8x256xf32>
    %120 = tpu.matmul %119, %10, %cst_30 {dimension_numbers = #tpu.dot_dimension_numbers<[1], [0], [0], [1], [0, 0, 1, 1], [], []>} : vector<8x64xbf16>, vector<64x256xbf16>, vector<8x256xf32> -> vector<8x256xf32>
    %121 = vector.extract_strided_slice %120 {offsets = [0, 0], sizes = [8, 128], strides = [1, 1]} : vector<8x256xf32> to vector<8x128xf32>
    %c24 = arith.constant 24 : index
    %c0_31 = arith.constant 0 : index
    %122 = vector.load %arg7[%c24, %c0_31] : memref<64x128xf32, #tpu.memory_space<vmem>>, vector<8x128xf32>
    %123 = arith.addf %121, %122 : vector<8x128xf32>
    %124 = arith.negf %123 : vector<8x128xf32>
    %125 = math.exp %124 : vector<8x128xf32>
    %cst_32 = arith.constant 1.000000e+00 : f32
    %126 = vector.broadcast %cst_32 : f32 to vector<8x128xf32>
    %127 = arith.addf %126, %125 : vector<8x128xf32>
    %128 = arith.divf %126, %127 : vector<8x128xf32>
    %129 = vector.extract_strided_slice %128 {offsets = [0, 0], sizes = [8, 32], strides = [1, 1]} : vector<8x128xf32> to vector<8x32xf32>
    %130 = vector.extract_strided_slice %128 {offsets = [0, 32], sizes = [8, 32], strides = [1, 1]} : vector<8x128xf32> to vector<8x32xf32>
    %131 = vector.extract_strided_slice %128 {offsets = [0, 96], sizes = [8, 32], strides = [1, 1]} : vector<8x128xf32> to vector<8x32xf32>
    %132 = vector.extract_strided_slice %123 {offsets = [0, 64], sizes = [8, 32], strides = [1, 1]} : vector<8x128xf32> to vector<8x32xf32>
    %133 = math.tanh %132 : vector<8x32xf32>
    %134 = arith.mulf %130, %96 : vector<8x32xf32>
    %135 = arith.mulf %129, %133 : vector<8x32xf32>
    %136 = arith.addf %134, %135 : vector<8x32xf32>
    %137 = math.tanh %136 : vector<8x32xf32>
    %138 = arith.mulf %131, %137 : vector<8x32xf32>
    %139 = vector.extract_strided_slice %120 {offsets = [0, 128], sizes = [8, 128], strides = [1, 1]} : vector<8x256xf32> to vector<8x128xf32>
    %140 = arith.addf %139, %9 : vector<8x128xf32>
    %141 = arith.negf %140 : vector<8x128xf32>
    %142 = math.exp %141 : vector<8x128xf32>
    %cst_33 = arith.constant 1.000000e+00 : f32
    %143 = vector.broadcast %cst_33 : f32 to vector<8x128xf32>
    %144 = arith.addf %143, %142 : vector<8x128xf32>
    %145 = arith.divf %143, %144 : vector<8x128xf32>
    %146 = vector.extract_strided_slice %145 {offsets = [0, 0], sizes = [8, 32], strides = [1, 1]} : vector<8x128xf32> to vector<8x32xf32>
    %147 = vector.extract_strided_slice %145 {offsets = [0, 32], sizes = [8, 32], strides = [1, 1]} : vector<8x128xf32> to vector<8x32xf32>
    %148 = vector.extract_strided_slice %145 {offsets = [0, 96], sizes = [8, 32], strides = [1, 1]} : vector<8x128xf32> to vector<8x32xf32>
    %149 = vector.extract_strided_slice %140 {offsets = [0, 64], sizes = [8, 32], strides = [1, 1]} : vector<8x128xf32> to vector<8x32xf32>
    %150 = math.tanh %149 : vector<8x32xf32>
    %151 = arith.mulf %147, %113 : vector<8x32xf32>
    %152 = arith.mulf %146, %150 : vector<8x32xf32>
    %153 = arith.addf %151, %152 : vector<8x32xf32>
    %154 = math.tanh %153 : vector<8x32xf32>
    %155 = arith.mulf %148, %154 : vector<8x32xf32>
    %c16_34 = arith.constant 16 : index
    %c0_35 = arith.constant 0 : index
    %156 = vector.load %arg8[%c16_34, %c0_35] : memref<64x32xf32, #tpu.memory_space<vmem>>, vector<8x32xf32>
    tpu.vector_store %arg8[%c16_34, %c0_35], %155 {strides = array<i32>} : memref<64x32xf32, #tpu.memory_space<vmem>>, vector<8x32xf32>,
    %157 = arith.truncf %138 : vector<8x32xf32> to vector<8x32xbf16>
    %158 = arith.truncf %155 : vector<8x32xf32> to vector<8x32xbf16>
    %159 = tpu.concatenate %157, %158 in 1 : vector<8x32xbf16>, vector<8x32xbf16> -> vector<8x64xbf16>
    %cst_36 = arith.constant dense<0.000000e+00> : vector<8x256xf32>
    %160 = tpu.matmul %159, %10, %cst_36 {dimension_numbers = #tpu.dot_dimension_numbers<[1], [0], [0], [1], [0, 0, 1, 1], [], []>} : vector<8x64xbf16>, vector<64x256xbf16>, vector<8x256xf32> -> vector<8x256xf32>
    %161 = vector.extract_strided_slice %160 {offsets = [0, 0], sizes = [8, 128], strides = [1, 1]} : vector<8x256xf32> to vector<8x128xf32>
    %c32 = arith.constant 32 : index
    %c0_37 = arith.constant 0 : index
    %162 = vector.load %arg7[%c32, %c0_37] : memref<64x128xf32, #tpu.memory_space<vmem>>, vector<8x128xf32>
    %163 = arith.addf %161, %162 : vector<8x128xf32>
    %164 = arith.negf %163 : vector<8x128xf32>
    %165 = math.exp %164 : vector<8x128xf32>
    %cst_38 = arith.constant 1.000000e+00 : f32
    %166 = vector.broadcast %cst_38 : f32 to vector<8x128xf32>
    %167 = arith.addf %166, %165 : vector<8x128xf32>
    %168 = arith.divf %166, %167 : vector<8x128xf32>
    %169 = vector.extract_strided_slice %168 {offsets = [0, 0], sizes = [8, 32], strides = [1, 1]} : vector<8x128xf32> to vector<8x32xf32>
    %170 = vector.extract_strided_slice %168 {offsets = [0, 32], sizes = [8, 32], strides = [1, 1]} : vector<8x128xf32> to vector<8x32xf32>
    %171 = vector.extract_strided_slice %168 {offsets = [0, 96], sizes = [8, 32], strides = [1, 1]} : vector<8x128xf32> to vector<8x32xf32>
    %172 = vector.extract_strided_slice %163 {offsets = [0, 64], sizes = [8, 32], strides = [1, 1]} : vector<8x128xf32> to vector<8x32xf32>
    %173 = math.tanh %172 : vector<8x32xf32>
    %174 = arith.mulf %170, %136 : vector<8x32xf32>
    %175 = arith.mulf %169, %173 : vector<8x32xf32>
    %176 = arith.addf %174, %175 : vector<8x32xf32>
    %177 = math.tanh %176 : vector<8x32xf32>
    %178 = arith.mulf %171, %177 : vector<8x32xf32>
    %179 = vector.extract_strided_slice %160 {offsets = [0, 128], sizes = [8, 128], strides = [1, 1]} : vector<8x256xf32> to vector<8x128xf32>
    %180 = arith.addf %179, %9 : vector<8x128xf32>
    %181 = arith.negf %180 : vector<8x128xf32>
    %182 = math.exp %181 : vector<8x128xf32>
    %cst_39 = arith.constant 1.000000e+00 : f32
    %183 = vector.broadcast %cst_39 : f32 to vector<8x128xf32>
    %184 = arith.addf %183, %182 : vector<8x128xf32>
    %185 = arith.divf %183, %184 : vector<8x128xf32>
    %186 = vector.extract_strided_slice %185 {offsets = [0, 0], sizes = [8, 32], strides = [1, 1]} : vector<8x128xf32> to vector<8x32xf32>
    %187 = vector.extract_strided_slice %185 {offsets = [0, 32], sizes = [8, 32], strides = [1, 1]} : vector<8x128xf32> to vector<8x32xf32>
    %188 = vector.extract_strided_slice %185 {offsets = [0, 96], sizes = [8, 32], strides = [1, 1]} : vector<8x128xf32> to vector<8x32xf32>
    %189 = vector.extract_strided_slice %180 {offsets = [0, 64], sizes = [8, 32], strides = [1, 1]} : vector<8x128xf32> to vector<8x32xf32>
    %190 = math.tanh %189 : vector<8x32xf32>
    %191 = arith.mulf %187, %153 : vector<8x32xf32>
    %192 = arith.mulf %186, %190 : vector<8x32xf32>
    %193 = arith.addf %191, %192 : vector<8x32xf32>
    %194 = math.tanh %193 : vector<8x32xf32>
    %195 = arith.mulf %188, %194 : vector<8x32xf32>
    %c24_40 = arith.constant 24 : index
    %c0_41 = arith.constant 0 : index
    %196 = vector.load %arg8[%c24_40, %c0_41] : memref<64x32xf32, #tpu.memory_space<vmem>>, vector<8x32xf32>
    tpu.vector_store %arg8[%c24_40, %c0_41], %195 {strides = array<i32>} : memref<64x32xf32, #tpu.memory_space<vmem>>, vector<8x32xf32>,
    %197 = arith.truncf %178 : vector<8x32xf32> to vector<8x32xbf16>
    %198 = arith.truncf %195 : vector<8x32xf32> to vector<8x32xbf16>
    %199 = tpu.concatenate %197, %198 in 1 : vector<8x32xbf16>, vector<8x32xbf16> -> vector<8x64xbf16>
    %cst_42 = arith.constant dense<0.000000e+00> : vector<8x256xf32>
    %200 = tpu.matmul %199, %10, %cst_42 {dimension_numbers = #tpu.dot_dimension_numbers<[1], [0], [0], [1], [0, 0, 1, 1], [], []>} : vector<8x64xbf16>, vector<64x256xbf16>, vector<8x256xf32> -> vector<8x256xf32>
    %201 = vector.extract_strided_slice %200 {offsets = [0, 0], sizes = [8, 128], strides = [1, 1]} : vector<8x256xf32> to vector<8x128xf32>
    %c40 = arith.constant 40 : index
    %c0_43 = arith.constant 0 : index
    %202 = vector.load %arg7[%c40, %c0_43] : memref<64x128xf32, #tpu.memory_space<vmem>>, vector<8x128xf32>
    %203 = arith.addf %201, %202 : vector<8x128xf32>
    %204 = arith.negf %203 : vector<8x128xf32>
    %205 = math.exp %204 : vector<8x128xf32>
    %cst_44 = arith.constant 1.000000e+00 : f32
    %206 = vector.broadcast %cst_44 : f32 to vector<8x128xf32>
    %207 = arith.addf %206, %205 : vector<8x128xf32>
    %208 = arith.divf %206, %207 : vector<8x128xf32>
    %209 = vector.extract_strided_slice %208 {offsets = [0, 0], sizes = [8, 32], strides = [1, 1]} : vector<8x128xf32> to vector<8x32xf32>
    %210 = vector.extract_strided_slice %208 {offsets = [0, 32], sizes = [8, 32], strides = [1, 1]} : vector<8x128xf32> to vector<8x32xf32>
    %211 = vector.extract_strided_slice %208 {offsets = [0, 96], sizes = [8, 32], strides = [1, 1]} : vector<8x128xf32> to vector<8x32xf32>
    %212 = vector.extract_strided_slice %203 {offsets = [0, 64], sizes = [8, 32], strides = [1, 1]} : vector<8x128xf32> to vector<8x32xf32>
    %213 = math.tanh %212 : vector<8x32xf32>
    %214 = arith.mulf %210, %176 : vector<8x32xf32>
    %215 = arith.mulf %209, %213 : vector<8x32xf32>
    %216 = arith.addf %214, %215 : vector<8x32xf32>
    %217 = math.tanh %216 : vector<8x32xf32>
    %218 = arith.mulf %211, %217 : vector<8x32xf32>
    %219 = vector.extract_strided_slice %200 {offsets = [0, 128], sizes = [8, 128], strides = [1, 1]} : vector<8x256xf32> to vector<8x128xf32>
    %220 = arith.addf %219, %9 : vector<8x128xf32>
    %221 = arith.negf %220 : vector<8x128xf32>
    %222 = math.exp %221 : vector<8x128xf32>
    %cst_45 = arith.constant 1.000000e+00 : f32
    %223 = vector.broadcast %cst_45 : f32 to vector<8x128xf32>
    %224 = arith.addf %223, %222 : vector<8x128xf32>
    %225 = arith.divf %223, %224 : vector<8x128xf32>
    %226 = vector.extract_strided_slice %225 {offsets = [0, 0], sizes = [8, 32], strides = [1, 1]} : vector<8x128xf32> to vector<8x32xf32>
    %227 = vector.extract_strided_slice %225 {offsets = [0, 32], sizes = [8, 32], strides = [1, 1]} : vector<8x128xf32> to vector<8x32xf32>
    %228 = vector.extract_strided_slice %225 {offsets = [0, 96], sizes = [8, 32], strides = [1, 1]} : vector<8x128xf32> to vector<8x32xf32>
    %229 = vector.extract_strided_slice %220 {offsets = [0, 64], sizes = [8, 32], strides = [1, 1]} : vector<8x128xf32> to vector<8x32xf32>
    %230 = math.tanh %229 : vector<8x32xf32>
    %231 = arith.mulf %227, %193 : vector<8x32xf32>
    %232 = arith.mulf %226, %230 : vector<8x32xf32>
    %233 = arith.addf %231, %232 : vector<8x32xf32>
    %234 = math.tanh %233 : vector<8x32xf32>
    %235 = arith.mulf %228, %234 : vector<8x32xf32>
    %c32_46 = arith.constant 32 : index
    %c0_47 = arith.constant 0 : index
    %236 = vector.load %arg8[%c32_46, %c0_47] : memref<64x32xf32, #tpu.memory_space<vmem>>, vector<8x32xf32>
    tpu.vector_store %arg8[%c32_46, %c0_47], %235 {strides = array<i32>} : memref<64x32xf32, #tpu.memory_space<vmem>>, vector<8x32xf32>,
    %237 = arith.truncf %218 : vector<8x32xf32> to vector<8x32xbf16>
    %238 = arith.truncf %235 : vector<8x32xf32> to vector<8x32xbf16>
    %239 = tpu.concatenate %237, %238 in 1 : vector<8x32xbf16>, vector<8x32xbf16> -> vector<8x64xbf16>
    %cst_48 = arith.constant dense<0.000000e+00> : vector<8x256xf32>
    %240 = tpu.matmul %239, %10, %cst_48 {dimension_numbers = #tpu.dot_dimension_numbers<[1], [0], [0], [1], [0, 0, 1, 1], [], []>} : vector<8x64xbf16>, vector<64x256xbf16>, vector<8x256xf32> -> vector<8x256xf32>
    %241 = vector.extract_strided_slice %240 {offsets = [0, 0], sizes = [8, 128], strides = [1, 1]} : vector<8x256xf32> to vector<8x128xf32>
    %c48 = arith.constant 48 : index
    %c0_49 = arith.constant 0 : index
    %242 = vector.load %arg7[%c48, %c0_49] : memref<64x128xf32, #tpu.memory_space<vmem>>, vector<8x128xf32>
    %243 = arith.addf %241, %242 : vector<8x128xf32>
    %244 = arith.negf %243 : vector<8x128xf32>
    %245 = math.exp %244 : vector<8x128xf32>
    %cst_50 = arith.constant 1.000000e+00 : f32
    %246 = vector.broadcast %cst_50 : f32 to vector<8x128xf32>
    %247 = arith.addf %246, %245 : vector<8x128xf32>
    %248 = arith.divf %246, %247 : vector<8x128xf32>
    %249 = vector.extract_strided_slice %248 {offsets = [0, 0], sizes = [8, 32], strides = [1, 1]} : vector<8x128xf32> to vector<8x32xf32>
    %250 = vector.extract_strided_slice %248 {offsets = [0, 32], sizes = [8, 32], strides = [1, 1]} : vector<8x128xf32> to vector<8x32xf32>
    %251 = vector.extract_strided_slice %248 {offsets = [0, 96], sizes = [8, 32], strides = [1, 1]} : vector<8x128xf32> to vector<8x32xf32>
    %252 = vector.extract_strided_slice %243 {offsets = [0, 64], sizes = [8, 32], strides = [1, 1]} : vector<8x128xf32> to vector<8x32xf32>
    %253 = math.tanh %252 : vector<8x32xf32>
    %254 = arith.mulf %250, %216 : vector<8x32xf32>
    %255 = arith.mulf %249, %253 : vector<8x32xf32>
    %256 = arith.addf %254, %255 : vector<8x32xf32>
    %257 = math.tanh %256 : vector<8x32xf32>
    %258 = arith.mulf %251, %257 : vector<8x32xf32>
    %259 = vector.extract_strided_slice %240 {offsets = [0, 128], sizes = [8, 128], strides = [1, 1]} : vector<8x256xf32> to vector<8x128xf32>
    %260 = arith.addf %259, %9 : vector<8x128xf32>
    %261 = arith.negf %260 : vector<8x128xf32>
    %262 = math.exp %261 : vector<8x128xf32>
    %cst_51 = arith.constant 1.000000e+00 : f32
    %263 = vector.broadcast %cst_51 : f32 to vector<8x128xf32>
    %264 = arith.addf %263, %262 : vector<8x128xf32>
    %265 = arith.divf %263, %264 : vector<8x128xf32>
    %266 = vector.extract_strided_slice %265 {offsets = [0, 0], sizes = [8, 32], strides = [1, 1]} : vector<8x128xf32> to vector<8x32xf32>
    %267 = vector.extract_strided_slice %265 {offsets = [0, 32], sizes = [8, 32], strides = [1, 1]} : vector<8x128xf32> to vector<8x32xf32>
    %268 = vector.extract_strided_slice %265 {offsets = [0, 96], sizes = [8, 32], strides = [1, 1]} : vector<8x128xf32> to vector<8x32xf32>
    %269 = vector.extract_strided_slice %260 {offsets = [0, 64], sizes = [8, 32], strides = [1, 1]} : vector<8x128xf32> to vector<8x32xf32>
    %270 = math.tanh %269 : vector<8x32xf32>
    %271 = arith.mulf %267, %233 : vector<8x32xf32>
    %272 = arith.mulf %266, %270 : vector<8x32xf32>
    %273 = arith.addf %271, %272 : vector<8x32xf32>
    %274 = math.tanh %273 : vector<8x32xf32>
    %275 = arith.mulf %268, %274 : vector<8x32xf32>
    %c40_52 = arith.constant 40 : index
    %c0_53 = arith.constant 0 : index
    %276 = vector.load %arg8[%c40_52, %c0_53] : memref<64x32xf32, #tpu.memory_space<vmem>>, vector<8x32xf32>
    tpu.vector_store %arg8[%c40_52, %c0_53], %275 {strides = array<i32>} : memref<64x32xf32, #tpu.memory_space<vmem>>, vector<8x32xf32>,
    %277 = arith.truncf %258 : vector<8x32xf32> to vector<8x32xbf16>
    %278 = arith.truncf %275 : vector<8x32xf32> to vector<8x32xbf16>
    %279 = tpu.concatenate %277, %278 in 1 : vector<8x32xbf16>, vector<8x32xbf16> -> vector<8x64xbf16>
    %cst_54 = arith.constant dense<0.000000e+00> : vector<8x256xf32>
    %280 = tpu.matmul %279, %10, %cst_54 {dimension_numbers = #tpu.dot_dimension_numbers<[1], [0], [0], [1], [0, 0, 1, 1], [], []>} : vector<8x64xbf16>, vector<64x256xbf16>, vector<8x256xf32> -> vector<8x256xf32>
    %281 = vector.extract_strided_slice %280 {offsets = [0, 0], sizes = [8, 128], strides = [1, 1]} : vector<8x256xf32> to vector<8x128xf32>
    %c56 = arith.constant 56 : index
    %c0_55 = arith.constant 0 : index
    %282 = vector.load %arg7[%c56, %c0_55] : memref<64x128xf32, #tpu.memory_space<vmem>>, vector<8x128xf32>
    %283 = arith.addf %281, %282 : vector<8x128xf32>
    %284 = arith.negf %283 : vector<8x128xf32>
    %285 = math.exp %284 : vector<8x128xf32>
    %cst_56 = arith.constant 1.000000e+00 : f32
    %286 = vector.broadcast %cst_56 : f32 to vector<8x128xf32>
    %287 = arith.addf %286, %285 : vector<8x128xf32>
    %288 = arith.divf %286, %287 : vector<8x128xf32>
    %289 = vector.extract_strided_slice %288 {offsets = [0, 0], sizes = [8, 32], strides = [1, 1]} : vector<8x128xf32> to vector<8x32xf32>
    %290 = vector.extract_strided_slice %288 {offsets = [0, 32], sizes = [8, 32], strides = [1, 1]} : vector<8x128xf32> to vector<8x32xf32>
    %291 = vector.extract_strided_slice %288 {offsets = [0, 96], sizes = [8, 32], strides = [1, 1]} : vector<8x128xf32> to vector<8x32xf32>
    %292 = vector.extract_strided_slice %283 {offsets = [0, 64], sizes = [8, 32], strides = [1, 1]} : vector<8x128xf32> to vector<8x32xf32>
    %293 = math.tanh %292 : vector<8x32xf32>
    %294 = arith.mulf %290, %256 : vector<8x32xf32>
    %295 = arith.mulf %289, %293 : vector<8x32xf32>
    %296 = arith.addf %294, %295 : vector<8x32xf32>
    %297 = math.tanh %296 : vector<8x32xf32>
    %298 = arith.mulf %291, %297 : vector<8x32xf32>
    %299 = vector.extract_strided_slice %280 {offsets = [0, 128], sizes = [8, 128], strides = [1, 1]} : vector<8x256xf32> to vector<8x128xf32>
    %300 = arith.addf %299, %9 : vector<8x128xf32>
    %301 = arith.negf %300 : vector<8x128xf32>
    %302 = math.exp %301 : vector<8x128xf32>
    %cst_57 = arith.constant 1.000000e+00 : f32
    %303 = vector.broadcast %cst_57 : f32 to vector<8x128xf32>
    %304 = arith.addf %303, %302 : vector<8x128xf32>
    %305 = arith.divf %303, %304 : vector<8x128xf32>
    %306 = vector.extract_strided_slice %305 {offsets = [0, 0], sizes = [8, 32], strides = [1, 1]} : vector<8x128xf32> to vector<8x32xf32>
    %307 = vector.extract_strided_slice %305 {offsets = [0, 32], sizes = [8, 32], strides = [1, 1]} : vector<8x128xf32> to vector<8x32xf32>
    %308 = vector.extract_strided_slice %305 {offsets = [0, 96], sizes = [8, 32], strides = [1, 1]} : vector<8x128xf32> to vector<8x32xf32>
    %309 = vector.extract_strided_slice %300 {offsets = [0, 64], sizes = [8, 32], strides = [1, 1]} : vector<8x128xf32> to vector<8x32xf32>
    %310 = math.tanh %309 : vector<8x32xf32>
    %311 = arith.mulf %307, %273 : vector<8x32xf32>
    %312 = arith.mulf %306, %310 : vector<8x32xf32>
    %313 = arith.addf %311, %312 : vector<8x32xf32>
    %314 = math.tanh %313 : vector<8x32xf32>
    %315 = arith.mulf %308, %314 : vector<8x32xf32>
    %c48_58 = arith.constant 48 : index
    %c0_59 = arith.constant 0 : index
    %316 = vector.load %arg8[%c48_58, %c0_59] : memref<64x32xf32, #tpu.memory_space<vmem>>, vector<8x32xf32>
    tpu.vector_store %arg8[%c48_58, %c0_59], %315 {strides = array<i32>} : memref<64x32xf32, #tpu.memory_space<vmem>>, vector<8x32xf32>,
    %317 = arith.truncf %298 : vector<8x32xf32> to vector<8x32xbf16>
    %318 = arith.truncf %315 : vector<8x32xf32> to vector<8x32xbf16>
    %319 = tpu.concatenate %317, %318 in 1 : vector<8x32xbf16>, vector<8x32xbf16> -> vector<8x64xbf16>
    %cst_60 = arith.constant dense<0.000000e+00> : vector<8x256xf32>
    %320 = tpu.matmul %319, %10, %cst_60 {dimension_numbers = #tpu.dot_dimension_numbers<[1], [0], [0], [1], [0, 0, 1, 1], [], []>} : vector<8x64xbf16>, vector<64x256xbf16>, vector<8x256xf32> -> vector<8x256xf32>
    %321 = vector.extract_strided_slice %320 {offsets = [0, 128], sizes = [8, 128], strides = [1, 1]} : vector<8x256xf32> to vector<8x128xf32>
    %322 = arith.addf %321, %9 : vector<8x128xf32>
    %323 = arith.negf %322 : vector<8x128xf32>
    %324 = math.exp %323 : vector<8x128xf32>
    %cst_61 = arith.constant 1.000000e+00 : f32
    %325 = vector.broadcast %cst_61 : f32 to vector<8x128xf32>
    %326 = arith.addf %325, %324 : vector<8x128xf32>
    %327 = arith.divf %325, %326 : vector<8x128xf32>
    %328 = vector.extract_strided_slice %327 {offsets = [0, 0], sizes = [8, 32], strides = [1, 1]} : vector<8x128xf32> to vector<8x32xf32>
    %329 = vector.extract_strided_slice %327 {offsets = [0, 32], sizes = [8, 32], strides = [1, 1]} : vector<8x128xf32> to vector<8x32xf32>
    %330 = vector.extract_strided_slice %327 {offsets = [0, 96], sizes = [8, 32], strides = [1, 1]} : vector<8x128xf32> to vector<8x32xf32>
    %331 = vector.extract_strided_slice %322 {offsets = [0, 64], sizes = [8, 32], strides = [1, 1]} : vector<8x128xf32> to vector<8x32xf32>
    %332 = math.tanh %331 : vector<8x32xf32>
    %333 = arith.mulf %329, %313 : vector<8x32xf32>
    %334 = arith.mulf %328, %332 : vector<8x32xf32>
    %335 = arith.addf %333, %334 : vector<8x32xf32>
    %336 = math.tanh %335 : vector<8x32xf32>
    %337 = arith.mulf %330, %336 : vector<8x32xf32>
    %c56_62 = arith.constant 56 : index
    %c0_63 = arith.constant 0 : index
    %338 = vector.load %arg8[%c56_62, %c0_63] : memref<64x32xf32, #tpu.memory_space<vmem>>, vector<8x32xf32>
    tpu.vector_store %arg8[%c56_62, %c0_63], %337 {strides = array<i32>} : memref<64x32xf32, #tpu.memory_space<vmem>>, vector<8x32xf32>,
    %c0_64 = arith.constant 0 : index
    %c0_65 = arith.constant 0 : index
    %339 = vector.load %arg8[%c0_64, %c0_65] : memref<64x32xf32, #tpu.memory_space<vmem>>, vector<64x32xf32>
    %340 = arith.truncf %339 : vector<64x32xf32> to vector<64x32xbf16>
    %c0_66 = arith.constant 0 : index
    %c0_67 = arith.constant 0 : index
    %341 = vector.load %arg4[%c0_66, %c0_67] : memref<32x128xbf16, #tpu.memory_space<vmem>>, vector<32x128xbf16>
    %cst_68 = arith.constant dense<0.000000e+00> : vector<64x128xf32>
    %342 = tpu.matmul %340, %341, %cst_68 {dimension_numbers = #tpu.dot_dimension_numbers<[1], [0], [0], [1], [0, 0, 1, 1], [], []>} : vector<64x32xbf16>, vector<32x128xbf16>, vector<64x128xf32> -> vector<64x128xf32>
    %c0_69 = arith.constant 0 : index
    %c0_70 = arith.constant 0 : index
    %343 = vector.load %arg5[%c0_69, %c0_70] : memref<1x128xf32, #tpu.memory_space<vmem>>, vector<1x128xf32>
    %344 = vector.broadcast %343 : vector<1x128xf32> to vector<64x128xf32>
    %345 = arith.addf %342, %344 : vector<64x128xf32>
    %c0_71 = arith.constant 0 : index
    %c0_72 = arith.constant 0 : index
    %346 = vector.load %arg6[%c0_71, %c0_72] : memref<64x128xf32, #tpu.memory_space<vmem>>, vector<64x128xf32>
    tpu.vector_store %arg6[%c0_71, %c0_72], %345 {strides = array<i32>} : memref<64x128xf32, #tpu.memory_space<vmem>>, vector<64x128xf32>,
    return
  }
}

</mosaic_0001>

<llo_original>
// kernel: custom_model_forward.1
$region0: #{custom_model_forward.1}
  #allocation0 [shape = 'u32[]', space=smem, size = 0x4, offset = 0x4, fixed_abs, tag = 'smem constant byte address 0x4 - core index']
  #allocation1 [shape = 'u32[144,128]{1,0:T(1,128)}', space=vmem, size = 0x12000, scoped, tag = 'internal scratch']
  #allocation2 [shape = 'f32[64,128]{1,0:T(8,128)}', space=vmem, size = 0x8000, scoped, tag = 'scratch operand']
  #allocation3 [shape = 'f32[64,32]{1,0:T(8,128)}', space=vmem, size = 0x8000, scoped, tag = 'scratch operand']
  %s0 = inlined_call_operand.vmem [shape: bf16[64,16], index: 0, kind: input, shape index: {}]
  %s1 = inlined_call_operand.vmem [shape: bf16[16,128], index: 1, kind: input, shape index: {}]
  %s2 = inlined_call_operand.vmem [shape: f32[2,128], index: 2, kind: input, shape index: {}]
  %s3 = inlined_call_operand.vmem [shape: bf16[64,256], index: 3, kind: input, shape index: {}]
  %s4 = inlined_call_operand.vmem [shape: bf16[32,128], index: 4, kind: input, shape index: {}]
  %s5 = inlined_call_operand.vmem [shape: f32[1,128], index: 5, kind: input, shape index: {}]
  %s6 = inlined_call_operand.vmem [shape: f32[64,128], index: 6, kind: output, shape index: {}]
  %s7 = sld [smem:[#allocation0]]
  $region34: #{custom_model_forward.1} parent=0
    _
  %s9 = ssub.s32 1, %s7
  %s10 = scalar_select 0, %s9, %s7
  // Predicated region
  $region2: #{custom_model_forward.1} parent=0 // pred_check
    _
  $region3: #{custom_model_forward.1} parent=0 // pred_check_branch
    %12 = sbr.rel (0) target = $region5
  $region4: #{custom_model_forward.1} parent=0 // pred_region
    _
  $region5: #{custom_model_forward.1} parent=0 // pred_fallthru
    _
  // Predicated region
  $region6: #{custom_model_forward.1} parent=0 // pred_check
    _
  $region7: #{custom_model_forward.1} parent=0 // pred_check_branch
    %14 = sbr.rel (0) target = $region9
  $region8: #{custom_model_forward.1} parent=0 // pred_region
    _
  $region9: #{custom_model_forward.1} parent=0 // pred_fallthru
    _
  // Predicated region
  $region10: #{custom_model_forward.1} parent=0 // pred_check
    _
  $region11: #{custom_model_forward.1} parent=0 // pred_check_branch
    %16 = sbr.rel (0) target = $region13
  $region12: #{custom_model_forward.1} parent=0 // pred_region
    _
  $region13: #{custom_model_forward.1} parent=0 // pred_fallthru
    _
  // Predicated region
  $region14: #{custom_model_forward.1} parent=0 // pred_check
    _
  $region15: #{custom_model_forward.1} parent=0 // pred_check_branch
    %18 = sbr.rel (0) target = $region17
  $region16: #{custom_model_forward.1} parent=0 // pred_region
    _
  $region17: #{custom_model_forward.1} parent=0 // pred_fallthru
    _
  // Predicated region
  $region18: #{custom_model_forward.1} parent=0 // pred_check
    _
  $region19: #{custom_model_forward.1} parent=0 // pred_check_branch
    %20 = sbr.rel (0) target = $region21
  $region20: #{custom_model_forward.1} parent=0 // pred_region
    _
  $region21: #{custom_model_forward.1} parent=0 // pred_fallthru
    _
  // Predicated region
  $region22: #{custom_model_forward.1} parent=0 // pred_check
    _
  $region23: #{custom_model_forward.1} parent=0 // pred_check_branch
    %22 = sbr.rel (0) target = $region25
  $region24: #{custom_model_forward.1} parent=0 // pred_region
    _
  $region25: #{custom_model_forward.1} parent=0 // pred_fallthru
    _
  %v24 = vld [vmem:[%s0] sm:$0xf]
  %v25 = vld [vmem:[%s0 + $0x4] sm:$0xf]
  %v26 = vld [vmem:[%s0 + $0x8] sm:$0xf]
  %v27 = vld [vmem:[%s0 + $0xc] sm:$0xf]
  %v28 = vld [vmem:[%s0 + $0x10] sm:$0xf]
  %v29 = vld [vmem:[%s0 + $0x14] sm:$0xf]
  %v30 = vld [vmem:[%s0 + $0x18] sm:$0xf]
  %v31 = vld [vmem:[%s0 + $0x1c] sm:$0xf]
  %v32 = vld [vmem:[%s1] sm:$0xf]
  %v33 = vld [vmem:[%s1 + $0x4] sm:$0xf]
  %v34 = vld [vmem:[%s2] sm:$0x1]
  %v35 = vlaneseq
  %v36 = vshrl.u32 %v35, 7
  %v37 = vsub.s32 0, %v36
  %v38 = vrot.slane %v34, %v37
  %v47 = vunpack.c.l.b16 %v24
  %v48 = vunpack.c.l.b16 %v25
  %v49 = vunpack.c.l.b16 %v26
  %v50 = vunpack.c.l.b16 %v27
  %v51 = vunpack.c.l.b16 %v28
  %v52 = vunpack.c.l.b16 %v29
  %v53 = vunpack.c.l.b16 %v30
  %v54 = vunpack.c.l.b16 %v31
  %v55 = vpack.c.b16 %v48, %v47
  %v56 = vpack.c.b16 %v50, %v49
  %v57 = vpack.c.b16 %v52, %v51
  %v58 = vpack.c.b16 %v54, %v53
  %v61 = vunpack.c.l.b16 %v32
  %v62 = vunpack.c.l.b16 %v33
  %v63 = vpack.c.b16 %v62, %v61
  %vm65 = vcmask 130048
  %v67 = vsel %vm65, %v55, 0
  %v70 = vsel %vm65, %v56, 0
  %v73 = vsel %vm65, %v57, 0
  %v76 = vsel %vm65, %v58, 0
  %78 = vmatprep.subr.bf16.mxu0 0
  %79 = vmatpush1.bf16.msra.mxu0 0
  %80 = vmatprep.subr.bf16.mxu0 0
  %81 = vmatpush1.bf16.msra.mxu0 0
  %82 = vmatprep.subr.bf16.mxu0 0
  %83 = vmatpush1.bf16.msra.mxu0 0
  %84 = vmatprep.subr.bf16.mxu0 0
  %85 = vmatpush1.bf16.msra.mxu0 0
  %86 = vmatprep.subr.bf16.mxu0 0
  %87 = vmatpush1.bf16.msra.mxu0 0
  %88 = vmatprep.subr.bf16.mxu0 0
  %89 = vmatpush1.bf16.msra.mxu0 0
  %90 = vmatprep.subr.bf16.mxu0 0
  %91 = vmatpush1.bf16.msra.mxu0 0
  %92 = vmatprep.subr.bf16.mxu0 0
  %93 = vmatpush1.bf16.msra.mxu0 %v63
  %94 = vmatprep.subr.bf16.mxu0 0
  %95 = vmatpush2.bf16.msra.mxu0 0
  %96 = vmatprep.subr.bf16.mxu0 0
  %97 = vmatpush2.bf16.msra.mxu0 0
  %98 = vmatprep.subr.bf16.mxu0 0
  %99 = vmatpush2.bf16.msra.mxu0 0
  %100 = vmatprep.subr.bf16.mxu0 0
  %101 = vmatpush2.bf16.msra.mxu0 0
  %102 = vmatprep.subr.bf16.mxu0 0
  %103 = vmatpush2.bf16.msra.mxu0 0
  %104 = vmatprep.subr.bf16.mxu0 0
  %105 = vmatpush2.bf16.msra.mxu0 0
  %106 = vmatprep.subr.bf16.mxu0 0
  %107 = vmatpush2.bf16.msra.mxu0 0
  %108 = vmatprep.subr.bf16.mxu0 0
  %109 = vmatpush2.bf16.msra.mxu0 0
  %110 = vmatprep.mubr.bf16.mxu0 0
  %111 = vmatmul.mubr.bf16.gmra.mxu0 %v67
  %v112 = vpop.f32.mrf.mxu0
  %v113 = vadd.f32 %v38, %v112
  %v114 = vpop.f32.mrf.mxu0
  %v115 = vpop.f32.mrf.mxu0
  %v116 = vadd.f32 %v38, %v115
  %v117 = vpop.f32.mrf.mxu0
  %118 = vmatprep.mubr.bf16.mxu0 0
  %119 = vmatmul.mubr.bf16.gmra.mxu0 %v70
  %v120 = vpop.f32.mrf.mxu0
  %v121 = vadd.f32 %v38, %v120
  %v122 = vpop.f32.mrf.mxu0
  %v123 = vpop.f32.mrf.mxu0
  %v124 = vadd.f32 %v38, %v123
  %v125 = vpop.f32.mrf.mxu0
  %126 = vmatprep.mubr.bf16.mxu0 0
  %127 = vmatmul.mubr.bf16.gmra.mxu0 %v73
  %v128 = vpop.f32.mrf.mxu0
  %v129 = vadd.f32 %v38, %v128
  %v130 = vpop.f32.mrf.mxu0
  %v131 = vpop.f32.mrf.mxu0
  %v132 = vadd.f32 %v38, %v131
  %v133 = vpop.f32.mrf.mxu0
  %134 = vmatprep.mubr.bf16.mxu0 0
  %135 = vmatmul.mubr.bf16.gmra.mxu0 %v76
  %v136 = vpop.f32.mrf.mxu0
  %v137 = vadd.f32 %v38, %v136
  %v138 = vpop.f32.mrf.mxu0
  %v139 = vpop.f32.mrf.mxu0
  %v140 = vadd.f32 %v38, %v139
  %v141 = vpop.f32.mrf.mxu0
  %142 = vdwg.mxu0
  %143 = vst [vmem:[#allocation2] sm:$0xff] %v113
  %144 = vst [vmem:[#allocation2 + $0x8] sm:$0xff] %v116
  %145 = vst [vmem:[#allocation2 + $0x10] sm:$0xff] %v121
  %146 = vst [vmem:[#allocation2 + $0x18] sm:$0xff] %v124
  %147 = vst [vmem:[#allocation2 + $0x20] sm:$0xff] %v129
  %148 = vst [vmem:[#allocation2 + $0x28] sm:$0xff] %v132
  %149 = vst [vmem:[#allocation2 + $0x30] sm:$0xff] %v137
  %150 = vst [vmem:[#allocation2 + $0x38] sm:$0xff] %v140
  %v151 = vld [vmem:[%s2 + $0x1] sm:$0x1]
  %v152 = vlaneseq
  %v153 = vshrl.u32 %v152, 7
  %v154 = vsub.s32 0, %v153
  %v155 = vrot.slane %v151, %v154
  %v156 = vld [vmem:[%s3] sm:$0xff]
  %v157 = vld [vmem:[%s3 + $0x8] sm:$0xff]
  %v158 = vld [vmem:[%s3 + $0x10] sm:$0xff]
  %v159 = vld [vmem:[%s3 + $0x18] sm:$0xff]
  %v160 = vld [vmem:[%s3 + $0x20] sm:$0xff]
  %v161 = vld [vmem:[%s3 + $0x28] sm:$0xff]
  %v162 = vld [vmem:[%s3 + $0x30] sm:$0xff]
  %v163 = vld [vmem:[%s3 + $0x38] sm:$0xff]
  %vm164 = vcmask 261120
  %v174 = vunpack.c.l.b16 %v156
  %v175 = vunpack.c.h.b16 %v156
  %v176 = vunpack.c.l.b16 %v157
  %v177 = vunpack.c.h.b16 %v157
  %v178 = vunpack.c.l.b16 %v158
  %v179 = vunpack.c.h.b16 %v158
  %v180 = vunpack.c.l.b16 %v159
  %v181 = vunpack.c.h.b16 %v159
  %v182 = vunpack.c.l.b16 %v160
  %v183 = vunpack.c.h.b16 %v160
  %v184 = vunpack.c.l.b16 %v161
  %v185 = vunpack.c.h.b16 %v161
  %v186 = vunpack.c.l.b16 %v162
  %v187 = vunpack.c.h.b16 %v162
  %v188 = vunpack.c.l.b16 %v163
  %v189 = vunpack.c.h.b16 %v163
  %v190 = vpack.c.b16 %v176, %v174
  %v191 = vpack.c.b16 %v177, %v175
  %v192 = vpack.c.b16 %v180, %v178
  %v193 = vpack.c.b16 %v181, %v179
  %v194 = vpack.c.b16 %v184, %v182
  %v195 = vpack.c.b16 %v185, %v183
  %v196 = vpack.c.b16 %v188, %v186
  %v197 = vpack.c.b16 %v189, %v187
  %vm206 = vcmask 523264
  %v207 = vsel %vm206, 0, 0
  %209 = vmatprep.subr.bf16.mxu0 0
  %210 = vmatpush1.bf16.msra.mxu0 0
  %211 = vmatprep.subr.bf16.mxu0 0
  %212 = vmatpush1.bf16.msra.mxu0 0
  %213 = vmatprep.subr.bf16.mxu0 0
  %214 = vmatpush1.bf16.msra.mxu0 0
  %215 = vmatprep.subr.bf16.mxu0 0
  %216 = vmatpush1.bf16.msra.mxu0 0
  %217 = vmatprep.subr.bf16.mxu0 %v197
  %218 = vmatpush1.bf16.msra.mxu0 %v196
  %219 = vmatprep.subr.bf16.mxu0 %v195
  %220 = vmatpush1.bf16.msra.mxu0 %v194
  %221 = vmatprep.subr.bf16.mxu0 %v193
  %222 = vmatpush1.bf16.msra.mxu0 %v192
  %223 = vmatprep.subr.bf16.mxu0 %v191
  %224 = vmatpush1.bf16.msra.mxu0 %v190
  %225 = vmatprep.subr.bf16.mxu0 0
  %226 = vmatpush2.bf16.msra.mxu0 0
  %227 = vmatprep.subr.bf16.mxu0 0
  %228 = vmatpush2.bf16.msra.mxu0 0
  %229 = vmatprep.subr.bf16.mxu0 0
  %230 = vmatpush2.bf16.msra.mxu0 0
  %231 = vmatprep.subr.bf16.mxu0 0
  %232 = vmatpush2.bf16.msra.mxu0 0
  %233 = vmatprep.subr.bf16.mxu0 0
  %234 = vmatpush2.bf16.msra.mxu0 0
  %235 = vmatprep.subr.bf16.mxu0 0
  %236 = vmatpush2.bf16.msra.mxu0 0
  %237 = vmatprep.subr.bf16.mxu0 0
  %238 = vmatpush2.bf16.msra.mxu0 0
  %239 = vmatprep.subr.bf16.mxu0 0
  %240 = vmatpush2.bf16.msra.mxu0 0
  %241 = vmatprep.mubr.bf16.mxu0 0
  %242 = vmatmul.mubr.bf16.gmra.mxu0 %v207
  %v243 = vpop.f32.mrf.mxu0
  %v244 = vadd.f32 0.0, %v243
  %v245 = vpop.f32.mrf.mxu0
  %v246 = vpop.f32.mrf.mxu0
  %v247 = vpop.f32.mrf.mxu0
  %248 = vdwg.mxu0
  %v249 = vld [vmem:[#allocation2] sm:$0xff]
  %v250 = vadd.f32 %v244, %v249
  %v251 = vxor.u32 %v250, 2147483648
  %v252 = vmul.f32 %v251, 1.442695
  %v253 = vpow.pop %v252
  %v254 = vadd.f32 %v253, 1.0
  %v255 = vrcp.pop %v254
  %v256 = vmul.f32 1.0, %v255
  %v257 = vtanh.pop %v250
  %v258 = vmul.f32 %v256, 0.0
  %260 = vrot.lane.b32.xlu0 %v257, 64
  %v261 = vpop.permute.xlu0 %260
  %v263 = vmul.f32 %v256, %v261
  %265 = vrot.lane.b32.xlu0 %v263, 32
  %v266 = vpop.permute.xlu0 %265
  %v268 = vadd.f32 %v258, %v266
  %v269 = vtanh.pop %v268
  %271 = vrot.lane.b32.xlu0 %v269, 64
  %v272 = vpop.permute.xlu0 %271
  %v274 = vmul.f32 %v256, %v272
  %v275 = vpack.c.bf16 %v274, %v274
  %277 = vrot.lane.b32.xlu0 %v275, 32
  %v278 = vpop.permute.xlu0 %277
  %v280 = vsel %vm164, %v278, 0
  %v281 = vsel %vm206, %v280, 0
  %283 = vmatprep.subr.bf16.mxu0 0
  %284 = vmatpush1.bf16.msra.mxu0 0
  %285 = vmatprep.subr.bf16.mxu0 0
  %286 = vmatpush1.bf16.msra.mxu0 0
  %287 = vmatprep.subr.bf16.mxu0 0
  %288 = vmatpush1.bf16.msra.mxu0 0
  %289 = vmatprep.subr.bf16.mxu0 0
  %290 = vmatpush1.bf16.msra.mxu0 0
  %291 = vmatprep.subr.bf16.mxu0 %v197
  %292 = vmatpush1.bf16.msra.mxu0 %v196
  %293 = vmatprep.subr.bf16.mxu0 %v195
  %294 = vmatpush1.bf16.msra.mxu0 %v194
  %295 = vmatprep.subr.bf16.mxu0 %v193
  %296 = vmatpush1.bf16.msra.mxu0 %v192
  %297 = vmatprep.subr.bf16.mxu0 %v191
  %298 = vmatpush1.bf16.msra.mxu0 %v190
  %299 = vmatprep.subr.bf16.mxu0 0
  %300 = vmatpush2.bf16.msra.mxu0 0
  %301 = vmatprep.subr.bf16.mxu0 0
  %302 = vmatpush2.bf16.msra.mxu0 0
  %303 = vmatprep.subr.bf16.mxu0 0
  %304 = vmatpush2.bf16.msra.mxu0 0
  %305 = vmatprep.subr.bf16.mxu0 0
  %306 = vmatpush2.bf16.msra.mxu0 0
  %307 = vmatprep.subr.bf16.mxu0 0
  %308 = vmatpush2.bf16.msra.mxu0 0
  %309 = vmatprep.subr.bf16.mxu0 0
  %310 = vmatpush2.bf16.msra.mxu0 0
  %311 = vmatprep.subr.bf16.mxu0 0
  %312 = vmatpush2.bf16.msra.mxu0 0
  %313 = vmatprep.subr.bf16.mxu0 0
  %314 = vmatpush2.bf16.msra.mxu0 0
  %315 = vmatprep.mubr.bf16.mxu0 0
  %316 = vmatmul.mubr.bf16.gmra.mxu0 %v281
  %v317 = vpop.f32.mrf.mxu0
  %v318 = vadd.f32 0.0, %v317
  %v319 = vpop.f32.mrf.mxu0
  %v320 = vadd.f32 0.0, %v319
  %v321 = vpop.f32.mrf.mxu0
  %v322 = vpop.f32.mrf.mxu0
  %323 = vdwg.mxu0
  %v324 = vld [vmem:[#allocation2 + $0x8] sm:$0xff]
  %v325 = vadd.f32 %v318, %v324
  %v326 = vxor.u32 %v325, 2147483648
  %v327 = vmul.f32 %v326, 1.442695
  %v328 = vpow.pop %v327
  %v329 = vadd.f32 %v328, 1.0
  %v330 = vrcp.pop %v329
  %v331 = vmul.f32 1.0, %v330
  %v332 = vtanh.pop %v325
  %v333 = vmul.f32 %v331, %v268
  %335 = vrot.lane.b32.xlu0 %v332, 64
  %v336 = vpop.permute.xlu0 %335
  %v338 = vmul.f32 %v331, %v336
  %340 = vrot.lane.b32.xlu0 %v338, 32
  %v341 = vpop.permute.xlu0 %340
  %v343 = vadd.f32 %v333, %v341
  %v344 = vtanh.pop %v343
  %346 = vrot.lane.b32.xlu0 %v344, 64
  %v347 = vpop.permute.xlu0 %346
  %v349 = vmul.f32 %v331, %v347
  %v350 = vadd.f32 %v320, %v155
  %v351 = vxor.u32 %v350, 2147483648
  %v352 = vmul.f32 %v351, 1.442695
  %v353 = vpow.pop %v352
  %v354 = vadd.f32 %v353, 1.0
  %v355 = vrcp.pop %v354
  %v356 = vmul.f32 1.0, %v355
  %v357 = vtanh.pop %v350
  %v358 = vmul.f32 %v356, 0.0
  %360 = vrot.lane.b32.xlu0 %v357, 64
  %v361 = vpop.permute.xlu0 %360
  %v363 = vmul.f32 %v356, %v361
  %365 = vrot.lane.b32.xlu0 %v363, 32
  %v366 = vpop.permute.xlu0 %365
  %v368 = vadd.f32 %v358, %v366
  %v369 = vtanh.pop %v368
  %371 = vrot.lane.b32.xlu0 %v369, 64
  %v372 = vpop.permute.xlu0 %371
  %v374 = vmul.f32 %v356, %v372
  %376 = vrot.lane.b32.xlu0 %v374, 32
  %v377 = vpop.permute.xlu0 %376
  %379 = vst.msk [vmem:[#allocation3] sm:$0xff] %vm164, %v377
  %v380 = vpack.c.bf16 %v349, %v349
  %v381 = vpack.c.bf16 %v374, %v374
  %383 = vrot.lane.b32.xlu0 %v380, 32
  %v384 = vpop.permute.xlu0 %383
  %386 = vrot.lane.b32.xlu0 %v381, 64
  %v387 = vpop.permute.xlu0 %386
  %v390 = vsel %vm164, %v384, %v387
  %v391 = vsel %vm206, %v390, 0
  %393 = vmatprep.subr.bf16.mxu0 0
  %394 = vmatpush1.bf16.msra.mxu0 0
  %395 = vmatprep.subr.bf16.mxu0 0
  %396 = vmatpush1.bf16.msra.mxu0 0
  %397 = vmatprep.subr.bf16.mxu0 0
  %398 = vmatpush1.bf16.msra.mxu0 0
  %399 = vmatprep.subr.bf16.mxu0 0
  %400 = vmatpush1.bf16.msra.mxu0 0
  %401 = vmatprep.subr.bf16.mxu0 %v197
  %402 = vmatpush1.bf16.msra.mxu0 %v196
  %403 = vmatprep.subr.bf16.mxu0 %v195
  %404 = vmatpush1.bf16.msra.mxu0 %v194
  %405 = vmatprep.subr.bf16.mxu0 %v193
  %406 = vmatpush1.bf16.msra.mxu0 %v192
  %407 = vmatprep.subr.bf16.mxu0 %v191
  %408 = vmatpush1.bf16.msra.mxu0 %v190
  %409 = vmatprep.subr.bf16.mxu0 0
  %410 = vmatpush2.bf16.msra.mxu0 0
  %411 = vmatprep.subr.bf16.mxu0 0
  %412 = vmatpush2.bf16.msra.mxu0 0
  %413 = vmatprep.subr.bf16.mxu0 0
  %414 = vmatpush2.bf16.msra.mxu0 0
  %415 = vmatprep.subr.bf16.mxu0 0
  %416 = vmatpush2.bf16.msra.mxu0 0
  %417 = vmatprep.subr.bf16.mxu0 0
  %418 = vmatpush2.bf16.msra.mxu0 0
  %419 = vmatprep.subr.bf16.mxu0 0
  %420 = vmatpush2.bf16.msra.mxu0 0
  %421 = vmatprep.subr.bf16.mxu0 0
  %422 = vmatpush2.bf16.msra.mxu0 0
  %423 = vmatprep.subr.bf16.mxu0 0
  %424 = vmatpush2.bf16.msra.mxu0 0
  %425 = vmatprep.mubr.bf16.mxu0 0
  %426 = vmatmul.mubr.bf16.gmra.mxu0 %v391
  %v427 = vpop.f32.mrf.mxu0
  %v428 = vadd.f32 0.0, %v427
  %v429 = vpop.f32.mrf.mxu0
  %v430 = vadd.f32 0.0, %v429
  %v431 = vpop.f32.mrf.mxu0
  %v432 = vpop.f32.mrf.mxu0
  %433 = vdwg.mxu0
  %v434 = vld [vmem:[#allocation2 + $0x10] sm:$0xff]
  %v435 = vadd.f32 %v428, %v434
  %v436 = vxor.u32 %v435, 2147483648
  %v437 = vmul.f32 %v436, 1.442695
  %v438 = vpow.pop %v437
  %v439 = vadd.f32 %v438, 1.0
  %v440 = vrcp.pop %v439
  %v441 = vmul.f32 1.0, %v440
  %v442 = vtanh.pop %v435
  %v443 = vmul.f32 %v441, %v343
  %445 = vrot.lane.b32.xlu0 %v442, 64
  %v446 = vpop.permute.xlu0 %445
  %v448 = vmul.f32 %v441, %v446
  %450 = vrot.lane.b32.xlu0 %v448, 32
  %v451 = vpop.permute.xlu0 %450
  %v453 = vadd.f32 %v443, %v451
  %v454 = vtanh.pop %v453
  %456 = vrot.lane.b32.xlu0 %v454, 64
  %v457 = vpop.permute.xlu0 %456
  %v459 = vmul.f32 %v441, %v457
  %v460 = vadd.f32 %v430, %v155
  %v461 = vxor.u32 %v460, 2147483648
  %v462 = vmul.f32 %v461, 1.442695
  %v463 = vpow.pop %v462
  %v464 = vadd.f32 %v463, 1.0
  %v465 = vrcp.pop %v464
  %v466 = vmul.f32 1.0, %v465
  %v467 = vtanh.pop %v460
  %v468 = vmul.f32 %v466, %v368
  %470 = vrot.lane.b32.xlu0 %v467, 64
  %v471 = vpop.permute.xlu0 %470
  %v473 = vmul.f32 %v466, %v471
  %475 = vrot.lane.b32.xlu0 %v473, 32
  %v476 = vpop.permute.xlu0 %475
  %v478 = vadd.f32 %v468, %v476
  %v479 = vtanh.pop %v478
  %481 = vrot.lane.b32.xlu0 %v479, 64
  %v482 = vpop.permute.xlu0 %481
  %v484 = vmul.f32 %v466, %v482
  %486 = vrot.lane.b32.xlu0 %v484, 32
  %v487 = vpop.permute.xlu0 %486
  %489 = vst.msk [vmem:[#allocation3 + $0x8] sm:$0xff] %vm164, %v487
  %v490 = vpack.c.bf16 %v459, %v459
  %v491 = vpack.c.bf16 %v484, %v484
  %493 = vrot.lane.b32.xlu0 %v490, 32
  %v494 = vpop.permute.xlu0 %493
  %496 = vrot.lane.b32.xlu0 %v491, 64
  %v497 = vpop.permute.xlu0 %496
  %v500 = vsel %vm164, %v494, %v497
  %v501 = vsel %vm206, %v500, 0
  %503 = vmatprep.subr.bf16.mxu0 0
  %504 = vmatpush1.bf16.msra.mxu0 0
  %505 = vmatprep.subr.bf16.mxu0 0
  %506 = vmatpush1.bf16.msra.mxu0 0
  %507 = vmatprep.subr.bf16.mxu0 0
  %508 = vmatpush1.bf16.msra.mxu0 0
  %509 = vmatprep.subr.bf16.mxu0 0
  %510 = vmatpush1.bf16.msra.mxu0 0
  %511 = vmatprep.subr.bf16.mxu0 %v197
  %512 = vmatpush1.bf16.msra.mxu0 %v196
  %513 = vmatprep.subr.bf16.mxu0 %v195
  %514 = vmatpush1.bf16.msra.mxu0 %v194
  %515 = vmatprep.subr.bf16.mxu0 %v193
  %516 = vmatpush1.bf16.msra.mxu0 %v192
  %517 = vmatprep.subr.bf16.mxu0 %v191
  %518 = vmatpush1.bf16.msra.mxu0 %v190
  %519 = vmatprep.subr.bf16.mxu0 0
  %520 = vmatpush2.bf16.msra.mxu0 0
  %521 = vmatprep.subr.bf16.mxu0 0
  %522 = vmatpush2.bf16.msra.mxu0 0
  %523 = vmatprep.subr.bf16.mxu0 0
  %524 = vmatpush2.bf16.msra.mxu0 0
  %525 = vmatprep.subr.bf16.mxu0 0
  %526 = vmatpush2.bf16.msra.mxu0 0
  %527 = vmatprep.subr.bf16.mxu0 0
  %528 = vmatpush2.bf16.msra.mxu0 0
  %529 = vmatprep.subr.bf16.mxu0 0
  %530 = vmatpush2.bf16.msra.mxu0 0
  %531 = vmatprep.subr.bf16.mxu0 0
  %532 = vmatpush2.bf16.msra.mxu0 0
  %533 = vmatprep.subr.bf16.mxu0 0
  %534 = vmatpush2.bf16.msra.mxu0 0
  %535 = vmatprep.mubr.bf16.mxu0 0
  %536 = vmatmul.mubr.bf16.gmra.mxu0 %v501
  %v537 = vpop.f32.mrf.mxu0
  %v538 = vadd.f32 0.0, %v537
  %v539 = vpop.f32.mrf.mxu0
  %v540 = vadd.f32 0.0, %v539
  %v541 = vpop.f32.mrf.mxu0
  %v542 = vpop.f32.mrf.mxu0
  %543 = vdwg.mxu0
  %v544 = vld [vmem:[#allocation2 + $0x18] sm:$0xff]
  %v545 = vadd.f32 %v538, %v544
  %v546 = vxor.u32 %v545, 2147483648
  %v547 = vmul.f32 %v546, 1.442695
  %v548 = vpow.pop %v547
  %v549 = vadd.f32 %v548, 1.0
  %v550 = vrcp.pop %v549
  %v551 = vmul.f32 1.0, %v550
  %v552 = vtanh.pop %v545
  %v553 = vmul.f32 %v551, %v453
  %555 = vrot.lane.b32.xlu0 %v552, 64
  %v556 = vpop.permute.xlu0 %555
  %v558 = vmul.f32 %v551, %v556
  %560 = vrot.lane.b32.xlu0 %v558, 32
  %v561 = vpop.permute.xlu0 %560
  %v563 = vadd.f32 %v553, %v561
  %v564 = vtanh.pop %v563
  %566 = vrot.lane.b32.xlu0 %v564, 64
  %v567 = vpop.permute.xlu0 %566
  %v569 = vmul.f32 %v551, %v567
  %v570 = vadd.f32 %v540, %v155
  %v571 = vxor.u32 %v570, 2147483648
  %v572 = vmul.f32 %v571, 1.442695
  %v573 = vpow.pop %v572
  %v574 = vadd.f32 %v573, 1.0
  %v575 = vrcp.pop %v574
  %v576 = vmul.f32 1.0, %v575
  %v577 = vtanh.pop %v570
  %v578 = vmul.f32 %v576, %v478
  %580 = vrot.lane.b32.xlu0 %v577, 64
  %v581 = vpop.permute.xlu0 %580
  %v583 = vmul.f32 %v576, %v581
  %585 = vrot.lane.b32.xlu0 %v583, 32
  %v586 = vpop.permute.xlu0 %585
  %v588 = vadd.f32 %v578, %v586
  %v589 = vtanh.pop %v588
  %591 = vrot.lane.b32.xlu0 %v589, 64
  %v592 = vpop.permute.xlu0 %591
  %v594 = vmul.f32 %v576, %v592
  %596 = vrot.lane.b32.xlu0 %v594, 32
  %v597 = vpop.permute.xlu0 %596
  %599 = vst.msk [vmem:[#allocation3 + $0x10] sm:$0xff] %vm164, %v597
  %v600 = vpack.c.bf16 %v569, %v569
  %v601 = vpack.c.bf16 %v594, %v594
  %603 = vrot.lane.b32.xlu0 %v600, 32
  %v604 = vpop.permute.xlu0 %603
  %606 = vrot.lane.b32.xlu0 %v601, 64
  %v607 = vpop.permute.xlu0 %606
  %v610 = vsel %vm164, %v604, %v607
  %v611 = vsel %vm206, %v610, 0
  %613 = vmatprep.subr.bf16.mxu0 0
  %614 = vmatpush1.bf16.msra.mxu0 0
  %615 = vmatprep.subr.bf16.mxu0 0
  %616 = vmatpush1.bf16.msra.mxu0 0
  %617 = vmatprep.subr.bf16.mxu0 0
  %618 = vmatpush1.bf16.msra.mxu0 0
  %619 = vmatprep.subr.bf16.mxu0 0
  %620 = vmatpush1.bf16.msra.mxu0 0
  %621 = vmatprep.subr.bf16.mxu0 %v197
  %622 = vmatpush1.bf16.msra.mxu0 %v196
  %623 = vmatprep.subr.bf16.mxu0 %v195
  %624 = vmatpush1.bf16.msra.mxu0 %v194
  %625 = vmatprep.subr.bf16.mxu0 %v193
  %626 = vmatpush1.bf16.msra.mxu0 %v192
  %627 = vmatprep.subr.bf16.mxu0 %v191
  %628 = vmatpush1.bf16.msra.mxu0 %v190
  %629 = vmatprep.subr.bf16.mxu0 0
  %630 = vmatpush2.bf16.msra.mxu0 0
  %631 = vmatprep.subr.bf16.mxu0 0
  %632 = vmatpush2.bf16.msra.mxu0 0
  %633 = vmatprep.subr.bf16.mxu0 0
  %634 = vmatpush2.bf16.msra.mxu0 0
  %635 = vmatprep.subr.bf16.mxu0 0
  %636 = vmatpush2.bf16.msra.mxu0 0
  %637 = vmatprep.subr.bf16.mxu0 0
  %638 = vmatpush2.bf16.msra.mxu0 0
  %639 = vmatprep.subr.bf16.mxu0 0
  %640 = vmatpush2.bf16.msra.mxu0 0
  %641 = vmatprep.subr.bf16.mxu0 0
  %642 = vmatpush2.bf16.msra.mxu0 0
  %643 = vmatprep.subr.bf16.mxu0 0
  %644 = vmatpush2.bf16.msra.mxu0 0
  %645 = vmatprep.mubr.bf16.mxu0 0
  %646 = vmatmul.mubr.bf16.gmra.mxu0 %v611
  %v647 = vpop.f32.mrf.mxu0
  %v648 = vadd.f32 0.0, %v647
  %v649 = vpop.f32.mrf.mxu0
  %v650 = vadd.f32 0.0, %v649
  %v651 = vpop.f32.mrf.mxu0
  %v652 = vpop.f32.mrf.mxu0
  %653 = vdwg.mxu0
  %v654 = vld [vmem:[#allocation2 + $0x20] sm:$0xff]
  %v655 = vadd.f32 %v648, %v654
  %v656 = vxor.u32 %v655, 2147483648
  %v657 = vmul.f32 %v656, 1.442695
  %v658 = vpow.pop %v657
  %v659 = vadd.f32 %v658, 1.0
  %v660 = vrcp.pop %v659
  %v661 = vmul.f32 1.0, %v660
  %v662 = vtanh.pop %v655
  %v663 = vmul.f32 %v661, %v563
  %665 = vrot.lane.b32.xlu0 %v662, 64
  %v666 = vpop.permute.xlu0 %665
  %v668 = vmul.f32 %v661, %v666
  %670 = vrot.lane.b32.xlu0 %v668, 32
  %v671 = vpop.permute.xlu0 %670
  %v673 = vadd.f32 %v663, %v671
  %v674 = vtanh.pop %v673
  %676 = vrot.lane.b32.xlu0 %v674, 64
  %v677 = vpop.permute.xlu0 %676
  %v679 = vmul.f32 %v661, %v677
  %v680 = vadd.f32 %v650, %v155
  %v681 = vxor.u32 %v680, 2147483648
  %v682 = vmul.f32 %v681, 1.442695
  %v683 = vpow.pop %v682
  %v684 = vadd.f32 %v683, 1.0
  %v685 = vrcp.pop %v684
  %v686 = vmul.f32 1.0, %v685
  %v687 = vtanh.pop %v680
  %v688 = vmul.f32 %v686, %v588
  %690 = vrot.lane.b32.xlu0 %v687, 64
  %v691 = vpop.permute.xlu0 %690
  %v693 = vmul.f32 %v686, %v691
  %695 = vrot.lane.b32.xlu0 %v693, 32
  %v696 = vpop.permute.xlu0 %695
  %v698 = vadd.f32 %v688, %v696
  %v699 = vtanh.pop %v698
  %701 = vrot.lane.b32.xlu0 %v699, 64
  %v702 = vpop.permute.xlu0 %701
  %v704 = vmul.f32 %v686, %v702
  %706 = vrot.lane.b32.xlu0 %v704, 32
  %v707 = vpop.permute.xlu0 %706
  %709 = vst.msk [vmem:[#allocation3 + $0x18] sm:$0xff] %vm164, %v707
  %v710 = vpack.c.bf16 %v679, %v679
  %v711 = vpack.c.bf16 %v704, %v704
  %713 = vrot.lane.b32.xlu0 %v710, 32
  %v714 = vpop.permute.xlu0 %713
  %716 = vrot.lane.b32.xlu0 %v711, 64
  %v717 = vpop.permute.xlu0 %716
  %v720 = vsel %vm164, %v714, %v717
  %v721 = vsel %vm206, %v720, 0
  %723 = vmatprep.subr.bf16.mxu0 0
  %724 = vmatpush1.bf16.msra.mxu0 0
  %725 = vmatprep.subr.bf16.mxu0 0
  %726 = vmatpush1.bf16.msra.mxu0 0
  %727 = vmatprep.subr.bf16.mxu0 0
  %728 = vmatpush1.bf16.msra.mxu0 0
  %729 = vmatprep.subr.bf16.mxu0 0
  %730 = vmatpush1.bf16.msra.mxu0 0
  %731 = vmatprep.subr.bf16.mxu0 %v197
  %732 = vmatpush1.bf16.msra.mxu0 %v196
  %733 = vmatprep.subr.bf16.mxu0 %v195
  %734 = vmatpush1.bf16.msra.mxu0 %v194
  %735 = vmatprep.subr.bf16.mxu0 %v193
  %736 = vmatpush1.bf16.msra.mxu0 %v192
  %737 = vmatprep.subr.bf16.mxu0 %v191
  %738 = vmatpush1.bf16.msra.mxu0 %v190
  %739 = vmatprep.subr.bf16.mxu0 0
  %740 = vmatpush2.bf16.msra.mxu0 0
  %741 = vmatprep.subr.bf16.mxu0 0
  %742 = vmatpush2.bf16.msra.mxu0 0
  %743 = vmatprep.subr.bf16.mxu0 0
  %744 = vmatpush2.bf16.msra.mxu0 0
  %745 = vmatprep.subr.bf16.mxu0 0
  %746 = vmatpush2.bf16.msra.mxu0 0
  %747 = vmatprep.subr.bf16.mxu0 0
  %748 = vmatpush2.bf16.msra.mxu0 0
  %749 = vmatprep.subr.bf16.mxu0 0
  %750 = vmatpush2.bf16.msra.mxu0 0
  %751 = vmatprep.subr.bf16.mxu0 0
  %752 = vmatpush2.bf16.msra.mxu0 0
  %753 = vmatprep.subr.bf16.mxu0 0
  %754 = vmatpush2.bf16.msra.mxu0 0
  %755 = vmatprep.mubr.bf16.mxu0 0
  %756 = vmatmul.mubr.bf16.gmra.mxu0 %v721
  %v757 = vpop.f32.mrf.mxu0
  %v758 = vadd.f32 0.0, %v757
  %v759 = vpop.f32.mrf.mxu0
  %v760 = vadd.f32 0.0, %v759
  %v761 = vpop.f32.mrf.mxu0
  %v762 = vpop.f32.mrf.mxu0
  %763 = vdwg.mxu0
  %v764 = vld [vmem:[#allocation2 + $0x28] sm:$0xff]
  %v765 = vadd.f32 %v758, %v764
  %v766 = vxor.u32 %v765, 2147483648
  %v767 = vmul.f32 %v766, 1.442695
  %v768 = vpow.pop %v767
  %v769 = vadd.f32 %v768, 1.0
  %v770 = vrcp.pop %v769
  %v771 = vmul.f32 1.0, %v770
  %v772 = vtanh.pop %v765
  %v773 = vmul.f32 %v771, %v673
  %775 = vrot.lane.b32.xlu0 %v772, 64
  %v776 = vpop.permute.xlu0 %775
  %v778 = vmul.f32 %v771, %v776
  %780 = vrot.lane.b32.xlu0 %v778, 32
  %v781 = vpop.permute.xlu0 %780
  %v783 = vadd.f32 %v773, %v781
  %v784 = vtanh.pop %v783
  %786 = vrot.lane.b32.xlu0 %v784, 64
  %v787 = vpop.permute.xlu0 %786
  %v789 = vmul.f32 %v771, %v787
  %v790 = vadd.f32 %v760, %v155
  %v791 = vxor.u32 %v790, 2147483648
  %v792 = vmul.f32 %v791, 1.442695
  %v793 = vpow.pop %v792
  %v794 = vadd.f32 %v793, 1.0
  %v795 = vrcp.pop %v794
  %v796 = vmul.f32 1.0, %v795
  %v797 = vtanh.pop %v790
  %v798 = vmul.f32 %v796, %v698
  %800 = vrot.lane.b32.xlu0 %v797, 64
  %v801 = vpop.permute.xlu0 %800
  %v803 = vmul.f32 %v796, %v801
  %805 = vrot.lane.b32.xlu0 %v803, 32
  %v806 = vpop.permute.xlu0 %805
  %v808 = vadd.f32 %v798, %v806
  %v809 = vtanh.pop %v808
  %811 = vrot.lane.b32.xlu0 %v809, 64
  %v812 = vpop.permute.xlu0 %811
  %v814 = vmul.f32 %v796, %v812
  %816 = vrot.lane.b32.xlu0 %v814, 32
  %v817 = vpop.permute.xlu0 %816
  %819 = vst.msk [vmem:[#allocation3 + $0x20] sm:$0xff] %vm164, %v817
  %v820 = vpack.c.bf16 %v789, %v789
  %v821 = vpack.c.bf16 %v814, %v814
  %823 = vrot.lane.b32.xlu0 %v820, 32
  %v824 = vpop.permute.xlu0 %823
  %826 = vrot.lane.b32.xlu0 %v821, 64
  %v827 = vpop.permute.xlu0 %826
  %v830 = vsel %vm164, %v824, %v827
  %v831 = vsel %vm206, %v830, 0
  %833 = vmatprep.subr.bf16.mxu0 0
  %834 = vmatpush1.bf16.msra.mxu0 0
  %835 = vmatprep.subr.bf16.mxu0 0
  %836 = vmatpush1.bf16.msra.mxu0 0
  %837 = vmatprep.subr.bf16.mxu0 0
  %838 = vmatpush1.bf16.msra.mxu0 0
  %839 = vmatprep.subr.bf16.mxu0 0
  %840 = vmatpush1.bf16.msra.mxu0 0
  %841 = vmatprep.subr.bf16.mxu0 %v197
  %842 = vmatpush1.bf16.msra.mxu0 %v196
  %843 = vmatprep.subr.bf16.mxu0 %v195
  %844 = vmatpush1.bf16.msra.mxu0 %v194
  %845 = vmatprep.subr.bf16.mxu0 %v193
  %846 = vmatpush1.bf16.msra.mxu0 %v192
  %847 = vmatprep.subr.bf16.mxu0 %v191
  %848 = vmatpush1.bf16.msra.mxu0 %v190
  %849 = vmatprep.subr.bf16.mxu0 0
  %850 = vmatpush2.bf16.msra.mxu0 0
  %851 = vmatprep.subr.bf16.mxu0 0
  %852 = vmatpush2.bf16.msra.mxu0 0
  %853 = vmatprep.subr.bf16.mxu0 0
  %854 = vmatpush2.bf16.msra.mxu0 0
  %855 = vmatprep.subr.bf16.mxu0 0
  %856 = vmatpush2.bf16.msra.mxu0 0
  %857 = vmatprep.subr.bf16.mxu0 0
  %858 = vmatpush2.bf16.msra.mxu0 0
  %859 = vmatprep.subr.bf16.mxu0 0
  %860 = vmatpush2.bf16.msra.mxu0 0
  %861 = vmatprep.subr.bf16.mxu0 0
  %862 = vmatpush2.bf16.msra.mxu0 0
  %863 = vmatprep.subr.bf16.mxu0 0
  %864 = vmatpush2.bf16.msra.mxu0 0
  %865 = vmatprep.mubr.bf16.mxu0 0
  %866 = vmatmul.mubr.bf16.gmra.mxu0 %v831
  %v867 = vpop.f32.mrf.mxu0
  %v868 = vadd.f32 0.0, %v867
  %v869 = vpop.f32.mrf.mxu0
  %v870 = vadd.f32 0.0, %v869
  %v871 = vpop.f32.mrf.mxu0
  %v872 = vpop.f32.mrf.mxu0
  %873 = vdwg.mxu0
  %v874 = vld [vmem:[#allocation2 + $0x30] sm:$0xff]
  %v875 = vadd.f32 %v868, %v874
  %v876 = vxor.u32 %v875, 2147483648
  %v877 = vmul.f32 %v876, 1.442695
  %v878 = vpow.pop %v877
  %v879 = vadd.f32 %v878, 1.0
  %v880 = vrcp.pop %v879
  %v881 = vmul.f32 1.0, %v880
  %v882 = vtanh.pop %v875
  %v883 = vmul.f32 %v881, %v783
  %885 = vrot.lane.b32.xlu0 %v882, 64
  %v886 = vpop.permute.xlu0 %885
  %v888 = vmul.f32 %v881, %v886
  %890 = vrot.lane.b32.xlu0 %v888, 32
  %v891 = vpop.permute.xlu0 %890
  %v893 = vadd.f32 %v883, %v891
  %v894 = vtanh.pop %v893
  %896 = vrot.lane.b32.xlu0 %v894, 64
  %v897 = vpop.permute.xlu0 %896
  %v899 = vmul.f32 %v881, %v897
  %v900 = vadd.f32 %v870, %v155
  %v901 = vxor.u32 %v900, 2147483648
  %v902 = vmul.f32 %v901, 1.442695
  %v903 = vpow.pop %v902
  %v904 = vadd.f32 %v903, 1.0
  %v905 = vrcp.pop %v904
  %v906 = vmul.f32 1.0, %v905
  %v907 = vtanh.pop %v900
  %v908 = vmul.f32 %v906, %v808
  %910 = vrot.lane.b32.xlu0 %v907, 64
  %v911 = vpop.permute.xlu0 %910
  %v913 = vmul.f32 %v906, %v911
  %915 = vrot.lane.b32.xlu0 %v913, 32
  %v916 = vpop.permute.xlu0 %915
  %v918 = vadd.f32 %v908, %v916
  %v919 = vtanh.pop %v918
  %921 = vrot.lane.b32.xlu0 %v919, 64
  %v922 = vpop.permute.xlu0 %921
  %v924 = vmul.f32 %v906, %v922
  %926 = vrot.lane.b32.xlu0 %v924, 32
  %v927 = vpop.permute.xlu0 %926
  %929 = vst.msk [vmem:[#allocation3 + $0x28] sm:$0xff] %vm164, %v927
  %v930 = vpack.c.bf16 %v899, %v899
  %v931 = vpack.c.bf16 %v924, %v924
  %933 = vrot.lane.b32.xlu0 %v930, 32
  %v934 = vpop.permute.xlu0 %933
  %936 = vrot.lane.b32.xlu0 %v931, 64
  %v937 = vpop.permute.xlu0 %936
  %v940 = vsel %vm164, %v934, %v937
  %v941 = vsel %vm206, %v940, 0
  %943 = vmatprep.subr.bf16.mxu0 0
  %944 = vmatpush1.bf16.msra.mxu0 0
  %945 = vmatprep.subr.bf16.mxu0 0
  %946 = vmatpush1.bf16.msra.mxu0 0
  %947 = vmatprep.subr.bf16.mxu0 0
  %948 = vmatpush1.bf16.msra.mxu0 0
  %949 = vmatprep.subr.bf16.mxu0 0
  %950 = vmatpush1.bf16.msra.mxu0 0
  %951 = vmatprep.subr.bf16.mxu0 %v197
  %952 = vmatpush1.bf16.msra.mxu0 %v196
  %953 = vmatprep.subr.bf16.mxu0 %v195
  %954 = vmatpush1.bf16.msra.mxu0 %v194
  %955 = vmatprep.subr.bf16.mxu0 %v193
  %956 = vmatpush1.bf16.msra.mxu0 %v192
  %957 = vmatprep.subr.bf16.mxu0 %v191
  %958 = vmatpush1.bf16.msra.mxu0 %v190
  %959 = vmatprep.subr.bf16.mxu0 0
  %960 = vmatpush2.bf16.msra.mxu0 0
  %961 = vmatprep.subr.bf16.mxu0 0
  %962 = vmatpush2.bf16.msra.mxu0 0
  %963 = vmatprep.subr.bf16.mxu0 0
  %964 = vmatpush2.bf16.msra.mxu0 0
  %965 = vmatprep.subr.bf16.mxu0 0
  %966 = vmatpush2.bf16.msra.mxu0 0
  %967 = vmatprep.subr.bf16.mxu0 0
  %968 = vmatpush2.bf16.msra.mxu0 0
  %969 = vmatprep.subr.bf16.mxu0 0
  %970 = vmatpush2.bf16.msra.mxu0 0
  %971 = vmatprep.subr.bf16.mxu0 0
  %972 = vmatpush2.bf16.msra.mxu0 0
  %973 = vmatprep.subr.bf16.mxu0 0
  %974 = vmatpush2.bf16.msra.mxu0 0
  %975 = vmatprep.mubr.bf16.mxu0 0
  %976 = vmatmul.mubr.bf16.gmra.mxu0 %v941
  %v977 = vpop.f32.mrf.mxu0
  %v978 = vadd.f32 0.0, %v977
  %v979 = vpop.f32.mrf.mxu0
  %v980 = vadd.f32 0.0, %v979
  %v981 = vpop.f32.mrf.mxu0
  %v982 = vpop.f32.mrf.mxu0
  %983 = vdwg.mxu0
  %v984 = vld [vmem:[#allocation2 + $0x38] sm:$0xff]
  %v985 = vadd.f32 %v978, %v984
  %v986 = vxor.u32 %v985, 2147483648
  %v987 = vmul.f32 %v986, 1.442695
  %v988 = vpow.pop %v987
  %v989 = vadd.f32 %v988, 1.0
  %v990 = vrcp.pop %v989
  %v991 = vmul.f32 1.0, %v990
  %v992 = vtanh.pop %v985
  %v993 = vmul.f32 %v991, %v893
  %995 = vrot.lane.b32.xlu0 %v992, 64
  %v996 = vpop.permute.xlu0 %995
  %v998 = vmul.f32 %v991, %v996
  %1000 = vrot.lane.b32.xlu0 %v998, 32
  %v1001 = vpop.permute.xlu0 %1000
  %v1003 = vadd.f32 %v993, %v1001
  %v1004 = vtanh.pop %v1003
  %1006 = vrot.lane.b32.xlu0 %v1004, 64
  %v1007 = vpop.permute.xlu0 %1006
  %v1009 = vmul.f32 %v991, %v1007
  %v1010 = vadd.f32 %v980, %v155
  %v1011 = vxor.u32 %v1010, 2147483648
  %v1012 = vmul.f32 %v1011, 1.442695
  %v1013 = vpow.pop %v1012
  %v1014 = vadd.f32 %v1013, 1.0
  %v1015 = vrcp.pop %v1014
  %v1016 = vmul.f32 1.0, %v1015
  %v1017 = vtanh.pop %v1010
  %v1018 = vmul.f32 %v1016, %v918
  %1020 = vrot.lane.b32.xlu0 %v1017, 64
  %v1021 = vpop.permute.xlu0 %1020
  %v1023 = vmul.f32 %v1016, %v1021
  %1025 = vrot.lane.b32.xlu0 %v1023, 32
  %v1026 = vpop.permute.xlu0 %1025
  %v1028 = vadd.f32 %v1018, %v1026
  %v1029 = vtanh.pop %v1028
  %1031 = vrot.lane.b32.xlu0 %v1029, 64
  %v1032 = vpop.permute.xlu0 %1031
  %v1034 = vmul.f32 %v1016, %v1032
  %1036 = vrot.lane.b32.xlu0 %v1034, 32
  %v1037 = vpop.permute.xlu0 %1036
  %1039 = vst.msk [vmem:[#allocation3 + $0x30] sm:$0xff] %vm164, %v1037
  %v1040 = vpack.c.bf16 %v1009, %v1009
  %v1041 = vpack.c.bf16 %v1034, %v1034
  %1043 = vrot.lane.b32.xlu0 %v1040, 32
  %v1044 = vpop.permute.xlu0 %1043
  %1046 = vrot.lane.b32.xlu0 %v1041, 64
  %v1047 = vpop.permute.xlu0 %1046
  %v1050 = vsel %vm164, %v1044, %v1047
  %v1051 = vsel %vm206, %v1050, 0
  %1053 = vmatprep.subr.bf16.mxu0 0
  %1054 = vmatpush1.bf16.msra.mxu0 0
  %1055 = vmatprep.subr.bf16.mxu0 0
  %1056 = vmatpush1.bf16.msra.mxu0 0
  %1057 = vmatprep.subr.bf16.mxu0 0
  %1058 = vmatpush1.bf16.msra.mxu0 0
  %1059 = vmatprep.subr.bf16.mxu0 0
  %1060 = vmatpush1.bf16.msra.mxu0 0
  %1061 = vmatprep.subr.bf16.mxu0 %v197
  %1062 = vmatpush1.bf16.msra.mxu0 %v196
  %1063 = vmatprep.subr.bf16.mxu0 %v195
  %1064 = vmatpush1.bf16.msra.mxu0 %v194
  %1065 = vmatprep.subr.bf16.mxu0 %v193
  %1066 = vmatpush1.bf16.msra.mxu0 %v192
  %1067 = vmatprep.subr.bf16.mxu0 %v191
  %1068 = vmatpush1.bf16.msra.mxu0 %v190
  %1069 = vmatprep.subr.bf16.mxu0 0
  %1070 = vmatpush2.bf16.msra.mxu0 0
  %1071 = vmatprep.subr.bf16.mxu0 0
  %1072 = vmatpush2.bf16.msra.mxu0 0
  %1073 = vmatprep.subr.bf16.mxu0 0
  %1074 = vmatpush2.bf16.msra.mxu0 0
  %1075 = vmatprep.subr.bf16.mxu0 0
  %1076 = vmatpush2.bf16.msra.mxu0 0
  %1077 = vmatprep.subr.bf16.mxu0 0
  %1078 = vmatpush2.bf16.msra.mxu0 0
  %1079 = vmatprep.subr.bf16.mxu0 0
  %1080 = vmatpush2.bf16.msra.mxu0 0
  %1081 = vmatprep.subr.bf16.mxu0 0
  %1082 = vmatpush2.bf16.msra.mxu0 0
  %1083 = vmatprep.subr.bf16.mxu0 0
  %1084 = vmatpush2.bf16.msra.mxu0 0
  %1085 = vmatprep.mubr.bf16.mxu0 0
  %1086 = vmatmul.mubr.bf16.gmra.mxu0 %v1051
  %v1087 = vpop.f32.mrf.mxu0
  %v1088 = vpop.f32.mrf.mxu0
  %v1089 = vadd.f32 0.0, %v1088
  %v1090 = vpop.f32.mrf.mxu0
  %v1091 = vpop.f32.mrf.mxu0
  %1092 = vdwg.mxu0
  %v1093 = vadd.f32 %v1089, %v155
  %v1094 = vxor.u32 %v1093, 2147483648
  %v1095 = vmul.f32 %v1094, 1.442695
  %v1096 = vpow.pop %v1095
  %v1097 = vadd.f32 %v1096, 1.0
  %v1098 = vrcp.pop %v1097
  %v1099 = vmul.f32 1.0, %v1098
  %v1100 = vtanh.pop %v1093
  %v1101 = vmul.f32 %v1099, %v1028
  %1103 = vrot.lane.b32.xlu0 %v1100, 64
  %v1104 = vpop.permute.xlu0 %1103
  %v1106 = vmul.f32 %v1099, %v1104
  %1108 = vrot.lane.b32.xlu0 %v1106, 32
  %v1109 = vpop.permute.xlu0 %1108
  %v1111 = vadd.f32 %v1101, %v1109
  %v1112 = vtanh.pop %v1111
  %1114 = vrot.lane.b32.xlu0 %v1112, 64
  %v1115 = vpop.permute.xlu0 %1114
  %v1117 = vmul.f32 %v1099, %v1115
  %1119 = vrot.lane.b32.xlu0 %v1117, 32
  %v1120 = vpop.permute.xlu0 %1119
  %1122 = vst.msk [vmem:[#allocation3 + $0x38] sm:$0xff] %vm164, %v1120
  %v1123 = vld [vmem:[#allocation3] sm:$0xff]
  %v1124 = vld [vmem:[#allocation3 + $0x8] sm:$0xff]
  %v1125 = vld [vmem:[#allocation3 + $0x10] sm:$0xff]
  %v1126 = vld [vmem:[#allocation3 + $0x18] sm:$0xff]
  %v1127 = vld [vmem:[#allocation3 + $0x20] sm:$0xff]
  %v1128 = vld [vmem:[#allocation3 + $0x28] sm:$0xff]
  %v1129 = vld [vmem:[#allocation3 + $0x30] sm:$0xff]
  %v1130 = vld [vmem:[#allocation3 + $0x38] sm:$0xff]
  %v1131 = vpack.c.bf16 %v1124, %v1123
  %v1132 = vpack.c.bf16 %v1126, %v1125
  %v1133 = vpack.c.bf16 %v1128, %v1127
  %v1134 = vpack.c.bf16 %v1130, %v1129
  %v1135 = vld [vmem:[%s4] sm:$0xf]
  %v1136 = vld [vmem:[%s4 + $0x4] sm:$0xf]
  %v1137 = vld [vmem:[%s4 + $0x8] sm:$0xf]
  %v1138 = vld [vmem:[%s4 + $0xc] sm:$0xf]
  %v1139 = vld [vmem:[%s5] sm:$0x1]
  %v1141 = vlaneseq
  %v1142 = vshrl.u32 %v1141, 7
  %v1143 = vsub.s32 0, %v1142
  %v1144 = vrot.slane %v1139, %v1143
  %v1150 = vunpack.c.l.b16 %v1135
  %v1151 = vunpack.c.l.b16 %v1136
  %v1152 = vunpack.c.l.b16 %v1137
  %v1153 = vunpack.c.l.b16 %v1138
  %v1154 = vpack.c.b16 %v1151, %v1150
  %v1155 = vpack.c.b16 %v1153, %v1152
  %v1159 = vsel %vm164, %v1131, 0
  %v1162 = vsel %vm164, %v1132, 0
  %v1165 = vsel %vm164, %v1133, 0
  %v1168 = vsel %vm164, %v1134, 0
  %1170 = vmatprep.subr.bf16.mxu0 0
  %1171 = vmatpush1.bf16.msra.mxu0 0
  %1172 = vmatprep.subr.bf16.mxu0 0
  %1173 = vmatpush1.bf16.msra.mxu0 0
  %1174 = vmatprep.subr.bf16.mxu0 0
  %1175 = vmatpush1.bf16.msra.mxu0 0
  %1176 = vmatprep.subr.bf16.mxu0 0
  %1177 = vmatpush1.bf16.msra.mxu0 0
  %1178 = vmatprep.subr.bf16.mxu0 0
  %1179 = vmatpush1.bf16.msra.mxu0 0
  %1180 = vmatprep.subr.bf16.mxu0 0
  %1181 = vmatpush1.bf16.msra.mxu0 0
  %1182 = vmatprep.subr.bf16.mxu0 0
  %1183 = vmatpush1.bf16.msra.mxu0 %v1155
  %1184 = vmatprep.subr.bf16.mxu0 0
  %1185 = vmatpush1.bf16.msra.mxu0 %v1154
  %1186 = vmatprep.subr.bf16.mxu0 0
  %1187 = vmatpush2.bf16.msra.mxu0 0
  %1188 = vmatprep.subr.bf16.mxu0 0
  %1189 = vmatpush2.bf16.msra.mxu0 0
  %1190 = vmatprep.subr.bf16.mxu0 0
  %1191 = vmatpush2.bf16.msra.mxu0 0
  %1192 = vmatprep.subr.bf16.mxu0 0
  %1193 = vmatpush2.bf16.msra.mxu0 0
  %1194 = vmatprep.subr.bf16.mxu0 0
  %1195 = vmatpush2.bf16.msra.mxu0 0
  %1196 = vmatprep.subr.bf16.mxu0 0
  %1197 = vmatpush2.bf16.msra.mxu0 0
  %1198 = vmatprep.subr.bf16.mxu0 0
  %1199 = vmatpush2.bf16.msra.mxu0 0
  %1200 = vmatprep.subr.bf16.mxu0 0
  %1201 = vmatpush2.bf16.msra.mxu0 0
  %1202 = vmatprep.mubr.bf16.mxu0 0
  %1203 = vmatmul.mubr.bf16.gmra.mxu0 %v1159
  %v1204 = vpop.f32.mrf.mxu0
  %v1205 = vadd.f32 %v1144, %v1204
  %v1206 = vpop.f32.mrf.mxu0
  %v1207 = vpop.f32.mrf.mxu0
  %v1208 = vadd.f32 %v1144, %v1207
  %v1209 = vpop.f32.mrf.mxu0
  %1210 = vmatprep.mubr.bf16.mxu0 0
  %1211 = vmatmul.mubr.bf16.gmra.mxu0 %v1162
  %v1212 = vpop.f32.mrf.mxu0
  %v1213 = vadd.f32 %v1144, %v1212
  %v1214 = vpop.f32.mrf.mxu0
  %v1215 = vpop.f32.mrf.mxu0
  %v1216 = vadd.f32 %v1144, %v1215
  %v1217 = vpop.f32.mrf.mxu0
  %1218 = vmatprep.mubr.bf16.mxu0 0
  %1219 = vmatmul.mubr.bf16.gmra.mxu0 %v1165
  %v1220 = vpop.f32.mrf.mxu0
  %v1221 = vadd.f32 %v1144, %v1220
  %v1222 = vpop.f32.mrf.mxu0
  %v1223 = vpop.f32.mrf.mxu0
  %v1224 = vadd.f32 %v1144, %v1223
  %v1225 = vpop.f32.mrf.mxu0
  %1226 = vmatprep.mubr.bf16.mxu0 0
  %1227 = vmatmul.mubr.bf16.gmra.mxu0 %v1168
  %v1228 = vpop.f32.mrf.mxu0
  %v1229 = vadd.f32 %v1144, %v1228
  %v1230 = vpop.f32.mrf.mxu0
  %v1231 = vpop.f32.mrf.mxu0
  %v1232 = vadd.f32 %v1144, %v1231
  %v1233 = vpop.f32.mrf.mxu0
  %1234 = vdwg.mxu0
  %1235 = vst [vmem:[%s6] sm:$0xff] %v1205
  %1236 = vst [vmem:[%s6 + $0x8] sm:$0xff] %v1208
  %1237 = vst [vmem:[%s6 + $0x10] sm:$0xff] %v1213
  %1238 = vst [vmem:[%s6 + $0x18] sm:$0xff] %v1216
  %1239 = vst [vmem:[%s6 + $0x20] sm:$0xff] %v1221
  %1240 = vst [vmem:[%s6 + $0x28] sm:$0xff] %v1224
  %1241 = vst [vmem:[%s6 + $0x30] sm:$0xff] %v1229
  %1242 = vst [vmem:[%s6 + $0x38] sm:$0xff] %v1232
  // Predicated region
  $region26: #{custom_model_forward.1} parent=0 // pred_check
    _
  $region27: #{custom_model_forward.1} parent=0 // pred_check_branch
    %1244 = sbr.rel (0) target = $region29
  $region28: #{custom_model_forward.1} parent=0 // pred_region
    _
  $region29: #{custom_model_forward.1} parent=0 // pred_fallthru
    _
  // Predicated region
  $region30: #{custom_model_forward.1} parent=0 // pred_check
    _
  $region31: #{custom_model_forward.1} parent=0 // pred_check_branch
    %1246 = sbr.rel (0) target = $region33
  $region32: #{custom_model_forward.1} parent=0 // pred_region
    _
  $region33: #{custom_model_forward.1} parent=0 // pred_fallthru
    _

</llo_original>
